<compile_context>
chip_gen: v7x
topology: tpu7x:2x2x1
jax: 0.10.0
libtpu: 0.0.40
codegen_flags: <defaults>
</compile_context>

<pallas_src>
import functools

import jax
import jax.numpy as jnp
from jax.experimental import pallas as pl
from jax.experimental.pallas import tpu as pltpu


def _spatial_attention_kernel(x_ref, r_ref, cw_ref, o_ref, sum_ref, max_ref,
                              *, C, H, W, K, Ct):
    # x_ref:  (Ct, H, W)  unpadded channel chunk for this batch element
    # r_ref:  (K, H, H)   zero-filled row-shift operators
    # cw_ref: (2, K, W, W) banded conv-weight matrices (avg map, max map)
    # o_ref:  (1, H, W)   sigmoid(conv) output
    c_blk = pl.program_id(1)
    n_blk = pl.num_programs(1)

    # ---- init accumulators at the first channel chunk of each batch element.
    @pl.when(c_blk == 0)
    def _init():
        sum_ref[...] = jnp.zeros((H, W), jnp.float32)
        max_ref[...] = jnp.full((H, W), -jnp.inf, jnp.float32)

    # ---- fused single pass over this (Ct, H, W) chunk: running sum + max.
    def body(i, carry):
        s, m = carry
        xi = x_ref[i].astype(jnp.float32)          # (H, W)
        return s + xi, jnp.maximum(m, xi)

    s0 = jnp.zeros((H, W), jnp.float32)
    m0 = jnp.full((H, W), -jnp.inf, jnp.float32)
    s, m = jax.lax.fori_loop(0, Ct, body, (s0, m0), unroll=min(Ct, 8))

    sum_ref[...] += s
    max_ref[...] = jnp.maximum(max_ref[...], m)

    # ---- finalize: zero-padded 7x7 conv over [avg, max] + sigmoid (on MXU).
    @pl.when(c_blk == n_blk - 1)
    def _finalize():
        avg = sum_ref[...] * (1.0 / C)             # (H, W) f32; mean over C
        mx = max_ref[...]                          # (H, W) f32; max over C

        acc = jnp.zeros((H, W), jnp.float32)
        for ky in range(K):                        # statically unrolled (K=7)
            z = jnp.dot(avg, cw_ref[0, ky, :, :],
                        preferred_element_type=jnp.float32)
            z = z + jnp.dot(mx, cw_ref[1, ky, :, :],
                            preferred_element_type=jnp.float32)
            acc = acc + jnp.dot(r_ref[ky, :, :], z,
                                preferred_element_type=jnp.float32)

        o_ref[...] = jax.nn.sigmoid(acc)[None, :, :].astype(o_ref.dtype)


def _conv_shift_operators(weight, H, W, K):
    """Fold the zero-padded KxK conv into per-row shift / band matrices."""
    pad = (K - 1) // 2
    w2 = jnp.asarray(weight, jnp.float32).reshape(2, K, K)

    # R[ky, y, i] = 1 iff i == y + ky - pad.  Rows that fall in the zero halo
    # match no i, which implements the zero padding along H.
    ky = jnp.arange(K)[:, None, None]
    y = jnp.arange(H)[None, :, None]
    i = jnp.arange(H)[None, None, :]
    r_mats = (i == y + ky - pad).astype(jnp.float32)             # (K, H, H)

    # Cw[c, ky, j, x] = w[c, ky, j - x + pad] if 0 <= j - x + pad < K else 0.
    # Out-of-band entries are zero, which implements the zero padding along W.
    j = jnp.arange(W)[:, None]
    x = jnp.arange(W)[None, :]
    t = j - x + pad                                              # (W, W)
    valid = (t >= 0) & (t < K)
    w_mats = jnp.where(valid[None, None],
                       w2[:, :, jnp.clip(t, 0, K - 1)], 0.0)     # (2, K, W, W)
    return r_mats, w_mats


def _pick_channel_chunk(C, H, W, itemsize, vmem_budget_bytes=2 * 1024 * 1024):
    """Largest divisor of C whose (Ct, H, W) chunk fits a per-buffer budget."""
    ct = max(1, min(C, vmem_budget_bytes // max(1, H * W * itemsize)))
    while C % ct:
        ct -= 1
    return ct


def spatial_attention(x, weight, *, kernel_size=7):
    """x: (B, C, H, W); weight: (1, 2, K, K) conv weight (no bias)."""
    B, C, H, W = x.shape
    K = kernel_size

    ct = _pick_channel_chunk(C, H, W, x.dtype.itemsize)
    n_c = C // ct

    r_mats, w_mats = _conv_shift_operators(weight, H, W, K)

    kernel = functools.partial(_spatial_attention_kernel,
                               C=C, H=H, W=W, K=K, Ct=ct)

    cost = pl.CostEstimate(
        flops=int(2 * B * C * H * W + B * K * (4 * H * W * W + 2 * H * H * W)),
        transcendentals=int(B * H * W),
        bytes_accessed=int(x.size * x.dtype.itemsize
                           + B * H * W * x.dtype.itemsize
                           + r_mats.size * 4 + w_mats.size * 4),
    )

    return pl.pallas_call(
        kernel,
        out_shape=jax.ShapeDtypeStruct((B, 1, H, W), x.dtype),
        grid_spec=pltpu.PrefetchScalarGridSpec(
            num_scalar_prefetch=0,
            grid=(B, n_c),
            in_specs=[
                # Unpadded input, channel-chunked; (H, W) are full-dim blocks.
                pl.BlockSpec((None, ct, H, W), lambda b, c: (b, c, 0, 0)),
                # Tiny conv-as-matmul constants; block index is constant, so
                # they are fetched once and stay resident across the grid.
                pl.BlockSpec((K, H, H), lambda b, c: (0, 0, 0)),
                pl.BlockSpec((2, K, W, W), lambda b, c: (0, 0, 0, 0)),
            ],
            out_specs=pl.BlockSpec((None, 1, H, W), lambda b, c: (b, 0, 0, 0)),
            scratch_shapes=[
                pltpu.VMEM((H, W), jnp.float32),   # running channel sum
                pltpu.VMEM((H, W), jnp.float32),   # running channel max
            ],
        ),
        compiler_params=pltpu.CompilerParams(
            dimension_semantics=("parallel", "arbitrary")),
        cost_estimate=cost,
    )(x, r_mats, w_mats)


def _reference(x, weight, *, kernel_size=7):
    """Plain-JAX reference mirroring the PyTorch forward (for validation)."""
    pad = (kernel_size - 1) // 2
    avg = jnp.mean(x, axis=1, keepdims=True)
    mx = jnp.max(x, axis=1, keepdims=True)
    cat = jnp.concatenate([avg, mx], axis=1)  # (B, 2, H, W)
    y = jax.lax.conv_general_dilated(
        cat, weight,
        window_strides=(1, 1),
        padding=((pad, pad), (pad, pad)),
        dimension_numbers=("NCHW", "OIHW", "NCHW"),
    )
    return jax.nn.sigmoid(y)


if __name__ == "__main__":
    key = jax.random.PRNGKey(0)
    k_x, k_w = jax.random.split(key)

    B, C, H, W = 2, 4, 16, 16
    K = 7

    x = jax.random.normal(k_x, (B, C, H, W), dtype=jnp.float32)
    # Deterministic synthetic conv weight (nn.Conv2d(2, 1, 7, bias=False) shape).
    weight = (jax.random.normal(k_w, (1, 2, K, K), dtype=jnp.float32)
              * (1.0 / (2 * K * K)) ** 0.5)

    out = jax.block_until_ready(spatial_attention(x, weight, kernel_size=K))
    ref = _reference(x, weight, kernel_size=K)

    assert out.shape == (B, 1, H, W)
    assert jnp.allclose(out, ref, atol=1e-5, rtol=1e-5), "mismatch vs reference"

    print("KERNEL_OK")
</pallas_src>

<mosaic_0001>
module attributes {stable_mosaic.version = 11 : i64} {
  func.func @_spatial_attention_kernel(%arg0: i32, %arg1: i32, %arg2: memref<1x4x16x16xf32, #tpu.memory_space<vmem>>, %arg3: memref<7x16x16xf32, #tpu.memory_space<vmem>>, %arg4: memref<2x7x16x16xf32, #tpu.memory_space<vmem>>, %arg5: memref<1x1x16x16xf32, #tpu.memory_space<vmem>>, %arg6: memref<16x16xf32, #tpu.memory_space<vmem>>, %arg7: memref<16x16xf32, #tpu.memory_space<vmem>>) attributes {dimension_semantics = [#tpu.dimension_semantics<parallel>, #tpu.dimension_semantics<arbitrary>], iteration_bounds = array<i64: 2, 1>, scalar_prefetch = 0 : i64, scratch_operands = 2 : i64, tpu.core_type = #tpu.core_type<tc>, window_params = [{transform_indices = @transform_0, window_bounds = array<i64: 1, 4, 16, 16>}, {pipeline_mode = #tpu.pipeline_mode<synchronous>, transform_indices = @transform_1, window_bounds = array<i64: 7, 16, 16>}, {pipeline_mode = #tpu.pipeline_mode<synchronous>, transform_indices = @transform_2, window_bounds = array<i64: 2, 7, 16, 16>}, {transform_indices = @transform_3, window_bounds = array<i64: 1, 1, 16, 16>}]} {
    %c0_i32 = arith.constant 0 : i32
    %0 = arith.cmpi eq, %arg1, %c0_i32 : i32
    %1 = arith.extui %0 : i1 to i32
    %c0_i32_0 = arith.constant 0 : i32
    %2 = arith.cmpi ne, %1, %c0_i32_0 : i32
    scf.if %2 {
      %cst_24 = arith.constant 0.000000e+00 : f32
      %34 = vector.broadcast %cst_24 : f32 to vector<16x16xf32>
      %c0_25 = arith.constant 0 : index
      %c0_26 = arith.constant 0 : index
      %35 = vector.load %arg6[%c0_25, %c0_26] : memref<16x16xf32, #tpu.memory_space<vmem>>, vector<16x16xf32>
      tpu.vector_store %arg6[%c0_25, %c0_26], %34 {strides = array<i32>} : memref<16x16xf32, #tpu.memory_space<vmem>>, vector<16x16xf32>,
      %cst_27 = arith.constant 0xFF800000 : f32
      %36 = vector.broadcast %cst_27 : f32 to vector<16x16xf32>
      %c0_28 = arith.constant 0 : index
      %c0_29 = arith.constant 0 : index
      %37 = vector.load %arg7[%c0_28, %c0_29] : memref<16x16xf32, #tpu.memory_space<vmem>>, vector<16x16xf32>
      tpu.vector_store %arg7[%c0_28, %c0_29], %36 {strides = array<i32>} : memref<16x16xf32, #tpu.memory_space<vmem>>, vector<16x16xf32>,
    } else {
    }
    %cst = arith.constant 0.000000e+00 : f32
    %3 = vector.broadcast %cst : f32 to vector<16x16xf32>
    %cst_1 = arith.constant 0xFF800000 : f32
    %4 = vector.broadcast %cst_1 : f32 to vector<16x16xf32>
    %c0_i32_2 = arith.constant 0 : i32
    %c0 = arith.constant 0 : index
    %5 = arith.index_cast %c0_i32_2 : i32 to index
    %c0_3 = arith.constant 0 : index
    %c0_4 = arith.constant 0 : index
    %6 = vector.load %arg2[%c0, %5, %c0_3, %c0_4] : memref<1x4x16x16xf32, #tpu.memory_space<vmem>>, vector<1x1x16x16xf32>
    %7 = vector.shape_cast %6 : vector<1x1x16x16xf32> to vector<16x16xf32>
    %8 = arith.addf %3, %7 : vector<16x16xf32>
    %9 = arith.maximumf %4, %7 : vector<16x16xf32>
    %c1_i32 = arith.constant 1 : i32
    %c0_5 = arith.constant 0 : index
    %10 = arith.index_cast %c1_i32 : i32 to index
    %c0_6 = arith.constant 0 : index
    %c0_7 = arith.constant 0 : index
    %11 = vector.load %arg2[%c0_5, %10, %c0_6, %c0_7] : memref<1x4x16x16xf32, #tpu.memory_space<vmem>>, vector<1x1x16x16xf32>
    %12 = vector.shape_cast %11 : vector<1x1x16x16xf32> to vector<16x16xf32>
    %13 = arith.addf %8, %12 : vector<16x16xf32>
    %14 = arith.maximumf %9, %12 : vector<16x16xf32>
    %c2_i32 = arith.constant 2 : i32
    %c0_8 = arith.constant 0 : index
    %15 = arith.index_cast %c2_i32 : i32 to index
    %c0_9 = arith.constant 0 : index
    %c0_10 = arith.constant 0 : index
    %16 = vector.load %arg2[%c0_8, %15, %c0_9, %c0_10] : memref<1x4x16x16xf32, #tpu.memory_space<vmem>>, vector<1x1x16x16xf32>
    %17 = vector.shape_cast %16 : vector<1x1x16x16xf32> to vector<16x16xf32>
    %18 = arith.addf %13, %17 : vector<16x16xf32>
    %19 = arith.maximumf %14, %17 : vector<16x16xf32>
    %c3_i32 = arith.constant 3 : i32
    %c0_11 = arith.constant 0 : index
    %20 = arith.index_cast %c3_i32 : i32 to index
    %c0_12 = arith.constant 0 : index
    %c0_13 = arith.constant 0 : index
    %21 = vector.load %arg2[%c0_11, %20, %c0_12, %c0_13] : memref<1x4x16x16xf32, #tpu.memory_space<vmem>>, vector<1x1x16x16xf32>
    %22 = vector.shape_cast %21 : vector<1x1x16x16xf32> to vector<16x16xf32>
    %23 = arith.addf %18, %22 : vector<16x16xf32>
    %24 = arith.maximumf %19, %22 : vector<16x16xf32>
    %c4_i32 = arith.constant 4 : i32
    %c0_14 = arith.constant 0 : index
    %c0_15 = arith.constant 0 : index
    %25 = vector.load %arg6[%c0_14, %c0_15] : memref<16x16xf32, #tpu.memory_space<vmem>>, vector<16x16xf32>
    %26 = arith.addf %25, %23 : vector<16x16xf32>
    %c0_16 = arith.constant 0 : index
    %c0_17 = arith.constant 0 : index
    %27 = vector.load %arg6[%c0_16, %c0_17] : memref<16x16xf32, #tpu.memory_space<vmem>>, vector<16x16xf32>
    tpu.vector_store %arg6[%c0_16, %c0_17], %26 {strides = array<i32>} : memref<16x16xf32, #tpu.memory_space<vmem>>, vector<16x16xf32>,
    %c0_18 = arith.constant 0 : index
    %c0_19 = arith.constant 0 : index
    %28 = vector.load %arg7[%c0_18, %c0_19] : memref<16x16xf32, #tpu.memory_space<vmem>>, vector<16x16xf32>
    %29 = arith.maximumf %28, %24 : vector<16x16xf32>
    %c0_20 = arith.constant 0 : index
    %c0_21 = arith.constant 0 : index
    %30 = vector.load %arg7[%c0_20, %c0_21] : memref<16x16xf32, #tpu.memory_space<vmem>>, vector<16x16xf32>
    tpu.vector_store %arg7[%c0_20, %c0_21], %29 {strides = array<i32>} : memref<16x16xf32, #tpu.memory_space<vmem>>, vector<16x16xf32>,
    %c0_i32_22 = arith.constant 0 : i32
    %31 = arith.cmpi eq, %arg1, %c0_i32_22 : i32
    %32 = arith.extui %31 : i1 to i32
    %c0_i32_23 = arith.constant 0 : i32
    %33 = arith.cmpi ne, %32, %c0_i32_23 : i32
    scf.if %33 {
      %c0_24 = arith.constant 0 : index
      %c0_25 = arith.constant 0 : index
      %34 = vector.load %arg6[%c0_24, %c0_25] : memref<16x16xf32, #tpu.memory_space<vmem>>, vector<16x16xf32>
      %cst_26 = arith.constant 2.500000e-01 : f32
      %35 = vector.broadcast %cst_26 : f32 to vector<16x16xf32>
      %36 = arith.mulf %34, %35 : vector<16x16xf32>
      %c0_27 = arith.constant 0 : index
      %c0_28 = arith.constant 0 : index
      %37 = vector.load %arg7[%c0_27, %c0_28] : memref<16x16xf32, #tpu.memory_space<vmem>>, vector<16x16xf32>
      %cst_29 = arith.constant 0.000000e+00 : f32
      %38 = vector.broadcast %cst_29 : f32 to vector<16x16xf32>
      %c0_30 = arith.constant 0 : index
      %c0_31 = arith.constant 0 : index
      %c0_32 = arith.constant 0 : index
      %c0_33 = arith.constant 0 : index
      %39 = vector.load %arg4[%c0_30, %c0_31, %c0_32, %c0_33] : memref<2x7x16x16xf32, #tpu.memory_space<vmem>>, vector<1x1x16x16xf32>
      %40 = vector.shape_cast %39 : vector<1x1x16x16xf32> to vector<16x16xf32>
      %cst_34 = arith.constant dense<0.000000e+00> : vector<16x16xf32>
      %41 = tpu.matmul %36, %40, %cst_34 {dimension_numbers = #tpu.dot_dimension_numbers<[1], [0], [0], [1], [0, 0, 1, 1], [], []>} : vector<16x16xf32>, vector<16x16xf32>, vector<16x16xf32> -> vector<16x16xf32>
      %c1 = arith.constant 1 : index
      %c0_35 = arith.constant 0 : index
      %c0_36 = arith.constant 0 : index
      %c0_37 = arith.constant 0 : index
      %42 = vector.load %arg4[%c1, %c0_35, %c0_36, %c0_37] : memref<2x7x16x16xf32, #tpu.memory_space<vmem>>, vector<1x1x16x16xf32>
      %43 = vector.shape_cast %42 : vector<1x1x16x16xf32> to vector<16x16xf32>
      %cst_38 = arith.constant dense<0.000000e+00> : vector<16x16xf32>
      %44 = tpu.matmul %37, %43, %cst_38 {dimension_numbers = #tpu.dot_dimension_numbers<[1], [0], [0], [1], [0, 0, 1, 1], [], []>} : vector<16x16xf32>, vector<16x16xf32>, vector<16x16xf32> -> vector<16x16xf32>
      %45 = arith.addf %41, %44 : vector<16x16xf32>
      %c0_39 = arith.constant 0 : index
      %c0_40 = arith.constant 0 : index
      %c0_41 = arith.constant 0 : index
      %46 = vector.load %arg3[%c0_39, %c0_40, %c0_41] : memref<7x16x16xf32, #tpu.memory_space<vmem>>, vector<1x16x16xf32>
      %47 = vector.shape_cast %46 : vector<1x16x16xf32> to vector<16x16xf32>
      %cst_42 = arith.constant dense<0.000000e+00> : vector<16x16xf32>
      %48 = tpu.matmul %47, %45, %cst_42 {dimension_numbers = #tpu.dot_dimension_numbers<[1], [0], [0], [1], [0, 0, 1, 1], [], []>} : vector<16x16xf32>, vector<16x16xf32>, vector<16x16xf32> -> vector<16x16xf32>
      %49 = arith.addf %38, %48 : vector<16x16xf32>
      %c0_43 = arith.constant 0 : index
      %c1_44 = arith.constant 1 : index
      %c0_45 = arith.constant 0 : index
      %c0_46 = arith.constant 0 : index
      %50 = vector.load %arg4[%c0_43, %c1_44, %c0_45, %c0_46] : memref<2x7x16x16xf32, #tpu.memory_space<vmem>>, vector<1x1x16x16xf32>
      %51 = vector.shape_cast %50 : vector<1x1x16x16xf32> to vector<16x16xf32>
      %cst_47 = arith.constant dense<0.000000e+00> : vector<16x16xf32>
      %52 = tpu.matmul %36, %51, %cst_47 {dimension_numbers = #tpu.dot_dimension_numbers<[1], [0], [0], [1], [0, 0, 1, 1], [], []>} : vector<16x16xf32>, vector<16x16xf32>, vector<16x16xf32> -> vector<16x16xf32>
      %c1_48 = arith.constant 1 : index
      %c1_49 = arith.constant 1 : index
      %c0_50 = arith.constant 0 : index
      %c0_51 = arith.constant 0 : index
      %53 = vector.load %arg4[%c1_48, %c1_49, %c0_50, %c0_51] : memref<2x7x16x16xf32, #tpu.memory_space<vmem>>, vector<1x1x16x16xf32>
      %54 = vector.shape_cast %53 : vector<1x1x16x16xf32> to vector<16x16xf32>
      %cst_52 = arith.constant dense<0.000000e+00> : vector<16x16xf32>
      %55 = tpu.matmul %37, %54, %cst_52 {dimension_numbers = #tpu.dot_dimension_numbers<[1], [0], [0], [1], [0, 0, 1, 1], [], []>} : vector<16x16xf32>, vector<16x16xf32>, vector<16x16xf32> -> vector<16x16xf32>
      %56 = arith.addf %52, %55 : vector<16x16xf32>
      %c1_53 = arith.constant 1 : index
      %c0_54 = arith.constant 0 : index
      %c0_55 = arith.constant 0 : index
      %57 = vector.load %arg3[%c1_53, %c0_54, %c0_55] : memref<7x16x16xf32, #tpu.memory_space<vmem>>, vector<1x16x16xf32>
      %58 = vector.shape_cast %57 : vector<1x16x16xf32> to vector<16x16xf32>
      %cst_56 = arith.constant dense<0.000000e+00> : vector<16x16xf32>
      %59 = tpu.matmul %58, %56, %cst_56 {dimension_numbers = #tpu.dot_dimension_numbers<[1], [0], [0], [1], [0, 0, 1, 1], [], []>} : vector<16x16xf32>, vector<16x16xf32>, vector<16x16xf32> -> vector<16x16xf32>
      %60 = arith.addf %49, %59 : vector<16x16xf32>
      %c0_57 = arith.constant 0 : index
      %c2 = arith.constant 2 : index
      %c0_58 = arith.constant 0 : index
      %c0_59 = arith.constant 0 : index
      %61 = vector.load %arg4[%c0_57, %c2, %c0_58, %c0_59] : memref<2x7x16x16xf32, #tpu.memory_space<vmem>>, vector<1x1x16x16xf32>
      %62 = vector.shape_cast %61 : vector<1x1x16x16xf32> to vector<16x16xf32>
      %cst_60 = arith.constant dense<0.000000e+00> : vector<16x16xf32>
      %63 = tpu.matmul %36, %62, %cst_60 {dimension_numbers = #tpu.dot_dimension_numbers<[1], [0], [0], [1], [0, 0, 1, 1], [], []>} : vector<16x16xf32>, vector<16x16xf32>, vector<16x16xf32> -> vector<16x16xf32>
      %c1_61 = arith.constant 1 : index
      %c2_62 = arith.constant 2 : index
      %c0_63 = arith.constant 0 : index
      %c0_64 = arith.constant 0 : index
      %64 = vector.load %arg4[%c1_61, %c2_62, %c0_63, %c0_64] : memref<2x7x16x16xf32, #tpu.memory_space<vmem>>, vector<1x1x16x16xf32>
      %65 = vector.shape_cast %64 : vector<1x1x16x16xf32> to vector<16x16xf32>
      %cst_65 = arith.constant dense<0.000000e+00> : vector<16x16xf32>
      %66 = tpu.matmul %37, %65, %cst_65 {dimension_numbers = #tpu.dot_dimension_numbers<[1], [0], [0], [1], [0, 0, 1, 1], [], []>} : vector<16x16xf32>, vector<16x16xf32>, vector<16x16xf32> -> vector<16x16xf32>
      %67 = arith.addf %63, %66 : vector<16x16xf32>
      %c2_66 = arith.constant 2 : index
      %c0_67 = arith.constant 0 : index
      %c0_68 = arith.constant 0 : index
      %68 = vector.load %arg3[%c2_66, %c0_67, %c0_68] : memref<7x16x16xf32, #tpu.memory_space<vmem>>, vector<1x16x16xf32>
      %69 = vector.shape_cast %68 : vector<1x16x16xf32> to vector<16x16xf32>
      %cst_69 = arith.constant dense<0.000000e+00> : vector<16x16xf32>
      %70 = tpu.matmul %69, %67, %cst_69 {dimension_numbers = #tpu.dot_dimension_numbers<[1], [0], [0], [1], [0, 0, 1, 1], [], []>} : vector<16x16xf32>, vector<16x16xf32>, vector<16x16xf32> -> vector<16x16xf32>
      %71 = arith.addf %60, %70 : vector<16x16xf32>
      %c0_70 = arith.constant 0 : index
      %c3 = arith.constant 3 : index
      %c0_71 = arith.constant 0 : index
      %c0_72 = arith.constant 0 : index
      %72 = vector.load %arg4[%c0_70, %c3, %c0_71, %c0_72] : memref<2x7x16x16xf32, #tpu.memory_space<vmem>>, vector<1x1x16x16xf32>
      %73 = vector.shape_cast %72 : vector<1x1x16x16xf32> to vector<16x16xf32>
      %cst_73 = arith.constant dense<0.000000e+00> : vector<16x16xf32>
      %74 = tpu.matmul %36, %73, %cst_73 {dimension_numbers = #tpu.dot_dimension_numbers<[1], [0], [0], [1], [0, 0, 1, 1], [], []>} : vector<16x16xf32>, vector<16x16xf32>, vector<16x16xf32> -> vector<16x16xf32>
      %c1_74 = arith.constant 1 : index
      %c3_75 = arith.constant 3 : index
      %c0_76 = arith.constant 0 : index
      %c0_77 = arith.constant 0 : index
      %75 = vector.load %arg4[%c1_74, %c3_75, %c0_76, %c0_77] : memref<2x7x16x16xf32, #tpu.memory_space<vmem>>, vector<1x1x16x16xf32>
      %76 = vector.shape_cast %75 : vector<1x1x16x16xf32> to vector<16x16xf32>
      %cst_78 = arith.constant dense<0.000000e+00> : vector<16x16xf32>
      %77 = tpu.matmul %37, %76, %cst_78 {dimension_numbers = #tpu.dot_dimension_numbers<[1], [0], [0], [1], [0, 0, 1, 1], [], []>} : vector<16x16xf32>, vector<16x16xf32>, vector<16x16xf32> -> vector<16x16xf32>
      %78 = arith.addf %74, %77 : vector<16x16xf32>
      %c3_79 = arith.constant 3 : index
      %c0_80 = arith.constant 0 : index
      %c0_81 = arith.constant 0 : index
      %79 = vector.load %arg3[%c3_79, %c0_80, %c0_81] : memref<7x16x16xf32, #tpu.memory_space<vmem>>, vector<1x16x16xf32>
      %80 = vector.shape_cast %79 : vector<1x16x16xf32> to vector<16x16xf32>
      %cst_82 = arith.constant dense<0.000000e+00> : vector<16x16xf32>
      %81 = tpu.matmul %80, %78, %cst_82 {dimension_numbers = #tpu.dot_dimension_numbers<[1], [0], [0], [1], [0, 0, 1, 1], [], []>} : vector<16x16xf32>, vector<16x16xf32>, vector<16x16xf32> -> vector<16x16xf32>
      %82 = arith.addf %71, %81 : vector<16x16xf32>
      %c0_83 = arith.constant 0 : index
      %c4 = arith.constant 4 : index
      %c0_84 = arith.constant 0 : index
      %c0_85 = arith.constant 0 : index
      %83 = vector.load %arg4[%c0_83, %c4, %c0_84, %c0_85] : memref<2x7x16x16xf32, #tpu.memory_space<vmem>>, vector<1x1x16x16xf32>
      %84 = vector.shape_cast %83 : vector<1x1x16x16xf32> to vector<16x16xf32>
      %cst_86 = arith.constant dense<0.000000e+00> : vector<16x16xf32>
      %85 = tpu.matmul %36, %84, %cst_86 {dimension_numbers = #tpu.dot_dimension_numbers<[1], [0], [0], [1], [0, 0, 1, 1], [], []>} : vector<16x16xf32>, vector<16x16xf32>, vector<16x16xf32> -> vector<16x16xf32>
      %c1_87 = arith.constant 1 : index
      %c4_88 = arith.constant 4 : index
      %c0_89 = arith.constant 0 : index
      %c0_90 = arith.constant 0 : index
      %86 = vector.load %arg4[%c1_87, %c4_88, %c0_89, %c0_90] : memref<2x7x16x16xf32, #tpu.memory_space<vmem>>, vector<1x1x16x16xf32>
      %87 = vector.shape_cast %86 : vector<1x1x16x16xf32> to vector<16x16xf32>
      %cst_91 = arith.constant dense<0.000000e+00> : vector<16x16xf32>
      %88 = tpu.matmul %37, %87, %cst_91 {dimension_numbers = #tpu.dot_dimension_numbers<[1], [0], [0], [1], [0, 0, 1, 1], [], []>} : vector<16x16xf32>, vector<16x16xf32>, vector<16x16xf32> -> vector<16x16xf32>
      %89 = arith.addf %85, %88 : vector<16x16xf32>
      %c4_92 = arith.constant 4 : index
      %c0_93 = arith.constant 0 : index
      %c0_94 = arith.constant 0 : index
      %90 = vector.load %arg3[%c4_92, %c0_93, %c0_94] : memref<7x16x16xf32, #tpu.memory_space<vmem>>, vector<1x16x16xf32>
      %91 = vector.shape_cast %90 : vector<1x16x16xf32> to vector<16x16xf32>
      %cst_95 = arith.constant dense<0.000000e+00> : vector<16x16xf32>
      %92 = tpu.matmul %91, %89, %cst_95 {dimension_numbers = #tpu.dot_dimension_numbers<[1], [0], [0], [1], [0, 0, 1, 1], [], []>} : vector<16x16xf32>, vector<16x16xf32>, vector<16x16xf32> -> vector<16x16xf32>
      %93 = arith.addf %82, %92 : vector<16x16xf32>
      %c0_96 = arith.constant 0 : index
      %c5 = arith.constant 5 : index
      %c0_97 = arith.constant 0 : index
      %c0_98 = arith.constant 0 : index
      %94 = vector.load %arg4[%c0_96, %c5, %c0_97, %c0_98] : memref<2x7x16x16xf32, #tpu.memory_space<vmem>>, vector<1x1x16x16xf32>
      %95 = vector.shape_cast %94 : vector<1x1x16x16xf32> to vector<16x16xf32>
      %cst_99 = arith.constant dense<0.000000e+00> : vector<16x16xf32>
      %96 = tpu.matmul %36, %95, %cst_99 {dimension_numbers = #tpu.dot_dimension_numbers<[1], [0], [0], [1], [0, 0, 1, 1], [], []>} : vector<16x16xf32>, vector<16x16xf32>, vector<16x16xf32> -> vector<16x16xf32>
      %c1_100 = arith.constant 1 : index
      %c5_101 = arith.constant 5 : index
      %c0_102 = arith.constant 0 : index
      %c0_103 = arith.constant 0 : index
      %97 = vector.load %arg4[%c1_100, %c5_101, %c0_102, %c0_103] : memref<2x7x16x16xf32, #tpu.memory_space<vmem>>, vector<1x1x16x16xf32>
      %98 = vector.shape_cast %97 : vector<1x1x16x16xf32> to vector<16x16xf32>
      %cst_104 = arith.constant dense<0.000000e+00> : vector<16x16xf32>
      %99 = tpu.matmul %37, %98, %cst_104 {dimension_numbers = #tpu.dot_dimension_numbers<[1], [0], [0], [1], [0, 0, 1, 1], [], []>} : vector<16x16xf32>, vector<16x16xf32>, vector<16x16xf32> -> vector<16x16xf32>
      %100 = arith.addf %96, %99 : vector<16x16xf32>
      %c5_105 = arith.constant 5 : index
      %c0_106 = arith.constant 0 : index
      %c0_107 = arith.constant 0 : index
      %101 = vector.load %arg3[%c5_105, %c0_106, %c0_107] : memref<7x16x16xf32, #tpu.memory_space<vmem>>, vector<1x16x16xf32>
      %102 = vector.shape_cast %101 : vector<1x16x16xf32> to vector<16x16xf32>
      %cst_108 = arith.constant dense<0.000000e+00> : vector<16x16xf32>
      %103 = tpu.matmul %102, %100, %cst_108 {dimension_numbers = #tpu.dot_dimension_numbers<[1], [0], [0], [1], [0, 0, 1, 1], [], []>} : vector<16x16xf32>, vector<16x16xf32>, vector<16x16xf32> -> vector<16x16xf32>
      %104 = arith.addf %93, %103 : vector<16x16xf32>
      %c0_109 = arith.constant 0 : index
      %c6 = arith.constant 6 : index
      %c0_110 = arith.constant 0 : index
      %c0_111 = arith.constant 0 : index
      %105 = vector.load %arg4[%c0_109, %c6, %c0_110, %c0_111] : memref<2x7x16x16xf32, #tpu.memory_space<vmem>>, vector<1x1x16x16xf32>
      %106 = vector.shape_cast %105 : vector<1x1x16x16xf32> to vector<16x16xf32>
      %cst_112 = arith.constant dense<0.000000e+00> : vector<16x16xf32>
      %107 = tpu.matmul %36, %106, %cst_112 {dimension_numbers = #tpu.dot_dimension_numbers<[1], [0], [0], [1], [0, 0, 1, 1], [], []>} : vector<16x16xf32>, vector<16x16xf32>, vector<16x16xf32> -> vector<16x16xf32>
      %c1_113 = arith.constant 1 : index
      %c6_114 = arith.constant 6 : index
      %c0_115 = arith.constant 0 : index
      %c0_116 = arith.constant 0 : index
      %108 = vector.load %arg4[%c1_113, %c6_114, %c0_115, %c0_116] : memref<2x7x16x16xf32, #tpu.memory_space<vmem>>, vector<1x1x16x16xf32>
      %109 = vector.shape_cast %108 : vector<1x1x16x16xf32> to vector<16x16xf32>
      %cst_117 = arith.constant dense<0.000000e+00> : vector<16x16xf32>
      %110 = tpu.matmul %37, %109, %cst_117 {dimension_numbers = #tpu.dot_dimension_numbers<[1], [0], [0], [1], [0, 0, 1, 1], [], []>} : vector<16x16xf32>, vector<16x16xf32>, vector<16x16xf32> -> vector<16x16xf32>
      %111 = arith.addf %107, %110 : vector<16x16xf32>
      %c6_118 = arith.constant 6 : index
      %c0_119 = arith.constant 0 : index
      %c0_120 = arith.constant 0 : index
      %112 = vector.load %arg3[%c6_118, %c0_119, %c0_120] : memref<7x16x16xf32, #tpu.memory_space<vmem>>, vector<1x16x16xf32>
      %113 = vector.shape_cast %112 : vector<1x16x16xf32> to vector<16x16xf32>
      %cst_121 = arith.constant dense<0.000000e+00> : vector<16x16xf32>
      %114 = tpu.matmul %113, %111, %cst_121 {dimension_numbers = #tpu.dot_dimension_numbers<[1], [0], [0], [1], [0, 0, 1, 1], [], []>} : vector<16x16xf32>, vector<16x16xf32>, vector<16x16xf32> -> vector<16x16xf32>
      %115 = arith.addf %104, %114 : vector<16x16xf32>
      %116 = arith.negf %115 : vector<16x16xf32>
      %117 = math.exp %116 : vector<16x16xf32>
      %cst_122 = arith.constant 1.000000e+00 : f32
      %118 = vector.broadcast %cst_122 : f32 to vector<16x16xf32>
      %119 = arith.addf %118, %117 : vector<16x16xf32>
      %120 = arith.divf %118, %119 : vector<16x16xf32>
      %121 = vector.shape_cast %120 : vector<16x16xf32> to vector<1x16x16xf32>
      %c0_123 = arith.constant 0 : index
      %c0_124 = arith.constant 0 : index
      %c0_125 = arith.constant 0 : index
      %c0_126 = arith.constant 0 : index
      %122 = vector.load %arg5[%c0_123, %c0_124, %c0_125, %c0_126] : memref<1x1x16x16xf32, #tpu.memory_space<vmem>>, vector<1x1x16x16xf32>
      %123 = vector.shape_cast %122 : vector<1x1x16x16xf32> to vector<1x16x16xf32>
      %124 = vector.shape_cast %121 : vector<1x16x16xf32> to vector<1x1x16x16xf32>
      tpu.vector_store %arg5[%c0_123, %c0_124, %c0_125, %c0_126], %124 {strides = array<i32>} : memref<1x1x16x16xf32, #tpu.memory_space<vmem>>, vector<1x1x16x16xf32>,
    } else {
    }
    return
  }
  func.func @transform_0(%arg0: i32, %arg1: i32) -> (i32, i32, i32, i32) {
    %c0_i32 = arith.constant 0 : i32
    %c0_i32_0 = arith.constant 0 : i32
    %c0_i32_1 = arith.constant 0 : i32
    return %arg0, %arg1, %c0_i32, %c0_i32_0 : i32, i32, i32, i32
  }
  func.func @transform_1(%arg0: i32, %arg1: i32) -> (i32, i32, i32) {
    %c0_i32 = arith.constant 0 : i32
    %c0_i32_0 = arith.constant 0 : i32
    %c0_i32_1 = arith.constant 0 : i32
    %c0_i32_2 = arith.constant 0 : i32
    return %c0_i32, %c0_i32_0, %c0_i32_1 : i32, i32, i32
  }
  func.func @transform_2(%arg0: i32, %arg1: i32) -> (i32, i32, i32, i32) {
    %c0_i32 = arith.constant 0 : i32
    %c0_i32_0 = arith.constant 0 : i32
    %c0_i32_1 = arith.constant 0 : i32
    %c0_i32_2 = arith.constant 0 : i32
    %c0_i32_3 = arith.constant 0 : i32
    return %c0_i32, %c0_i32_0, %c0_i32_1, %c0_i32_2 : i32, i32, i32, i32
  }
  func.func @transform_3(%arg0: i32, %arg1: i32) -> (i32, i32, i32, i32) {
    %c0_i32 = arith.constant 0 : i32
    %c0_i32_0 = arith.constant 0 : i32
    %c0_i32_1 = arith.constant 0 : i32
    %c0_i32_2 = arith.constant 0 : i32
    return %arg0, %c0_i32, %c0_i32_0, %c0_i32_1 : i32, i32, i32, i32
  }
}

</mosaic_0001>

<llo_original>
// kernel: tpu_custom_call.1
$region0: #{tpu_custom_call.1}
  #allocation0 [shape = 'u32[]', space=smem, size = 0x4, offset = 0x4, fixed_abs, tag = 'smem constant byte address 0x4 - core index']
  #allocation1 [shape = 'u32[144,128]{1,0:T(1,128)}', space=vmem, size = 0x12000, scoped, tag = 'internal scratch']
  #allocation2 [shape = 'f32[16,16]{1,0:T(8,128)}', space=vmem, size = 0x2000, scoped, tag = 'scratch operand']
  #allocation3 [shape = 'f32[16,16]{1,0:T(8,128)}', space=vmem, size = 0x2000, scoped, tag = 'scratch operand']
  %s0 = inlined_call_operand.hbm [shape: f32[2,4,16,16], index: 0, kind: input, shape index: {}]
  %s1 = inlined_call_operand.hbm [shape: f32[7,16,16], index: 1, kind: input, shape index: {}]
  %s2 = inlined_call_operand.hbm [shape: f32[2,7,16,16], index: 2, kind: input, shape index: {}]
  %s3 = inlined_call_operand.hbm [shape: f32[2,1,16,16], index: 3, kind: output, shape index: {}]
  %s4 = sld [smem:[#allocation0]]
  $region65: #{tpu_custom_call.1} parent=0
    _
  %s6 = ssub.s32 1, %s4
  %s7 = scalar_select 0, %s6, %s4
  $region1: #{tpu_custom_call.1} parent=0
    #allocation4 [shape = 'u8[65536]{0}', space=vmem, size = 0x10000, scoped, tag = 'input window, operand 0']
    #allocation5 [shape = 's32[2]{0}', space=sflag, size = 0x8, scoped, tag = 'scoped memory for tpu_custom_call.1']
    #allocation6 [shape = 's32[2]{0}', space=sflag, size = 0x8, scoped, tag = 'scoped memory for tpu_custom_call.1']
    #allocation7 [shape = 'u8[57344]{0}', space=vmem, size = 0xe000, scoped, tag = 'input window, operand 1, single buffered']
    #allocation8 [shape = 's32[1]{0}', space=sflag, size = 0x4, scoped, tag = 'scoped memory for tpu_custom_call.1']
    #allocation9 [shape = 'u8[114688]{0}', space=vmem, size = 0x1c000, scoped, tag = 'input window, operand 2, single buffered']
    #allocation10 [shape = 'u8[16384]{0}', space=vmem, size = 0x4000, scoped, tag = 'output window, operand 0']
    %8 = vsyncpa [#allocation5], 0
    %s9 = scalar_lea.sflag [#allocation5], 1
    %10 = vsyncpa %s9, 0
    %11 = vsyncpa [#allocation8], 0
    %12 = vsyncpa [#allocation6], 0
    %s13 = scalar_lea.sflag [#allocation6], 1
    %14 = vsyncpa %s13, 0
    loop: start=0, step=1, limit=4
    $region2: #{tpu_custom_call.1} parent=1 // loop_pre_header
      _
    $region3: #{tpu_custom_call.1} parent=1 // loop_header
      %s16 = sphi 0, %s20
      %p17 = scmp.ge.s32.totalorder %s16, 4
      %s23 = sphi 0, %s35
      %s24 = sphi 0, %s31
      %s25 = sphi 0, %s23
      %s26 = sphi 0, %s24
      %s27 = sphi 0, %s25
      %s28 = sphi 0, %s26
      %s40 = sphi 0, %s42
      %s43 = sphi 0, %s40
      %s44 = sphi 0, %s43
      %s60 = sphi 0, %s44
      %s64 = sphi 0, %s64
      %s66 = sphi 0, %s64
      %s67 = sphi 0, %s66
      %s81 = sphi 0, %s67
      %s85 = sphi 0, %s85
      %s87 = sphi 0, %s85
      %s88 = sphi 0, %s87
      %s102 = sphi 0, %s88
      %s108 = sphi 0, %s110
      %s111 = sphi 0, %s108
      %s112 = sphi 0, %s111
      %s128 = sphi 0, %s112
    $region4: #{tpu_custom_call.1} parent=1 // loop_header_branch
      %19 = sbr.rel (%p17) target = $region8
    $region5: #{tpu_custom_call.1} parent=1 // loop_body
      %s21 = ssub.s32 %s16, 1
      %s22 = ssub.s32 %s16, 2
      %s29 = sadd.s32 1, %s24
      %p30 = scmp.ge.s32.totalorder %s29, 1
      %s31 = scalar_select %p30, 0, %s29
      %s32 = sadd.s32 1, %s23
      %s33 = scalar_select %p30, %s32, %s23
      %p34 = scmp.ge.s32.totalorder %s33, 2
      %s35 = scalar_select %p34, 0, %s33
      %s36 = ssub.s32 %s23, %s35
      %s37 = ssub.s32 %s24, %s31
      %s38 = sor.u32 %s36, %s37
      %p39 = scmp.eq.s32.totalorder %s38, 0
      %s41 = sadd.s32 %s40, 1
      %s42 = scalar_select %p39, %s40, %s41
      %p45 = pneg %p39
      %p46 = scmp.eq.s32.totalorder %s16, 1
      %p47 = por %p45, %p46
      %p48 = scmp.ne.s32.totalorder %s40, %s43
      %p49 = scmp.eq.s32.totalorder %s16, 0
      %p50 = por %p48, %p49
      %p51 = scmp.ne.s32.totalorder %s40, %s43
      %p52 = scmp.eq.s32.totalorder %s21, 1
      %p53 = por %p51, %p52
      %p54 = scmp.ne.s32.totalorder %s43, %s44
      %p55 = scmp.eq.s32.totalorder %s21, 0
      %p56 = por %p54, %p55
      %p57 = scmp.ne.s32.totalorder %s43, %s44
      %p58 = scmp.eq.s32.totalorder %s22, 1
      %p59 = por %p57, %p58
      %p61 = scmp.ne.s32.totalorder %s44, %s60
      %p62 = scmp.eq.s32.totalorder %s22, 0
      %p63 = por %p61, %p62
      %s65 = sadd.s32 %s64, 1
      %p68 = scmp.eq.s32.totalorder %s16, 1
      %p69 = scmp.ne.s32.totalorder %s64, %s66
      %p70 = scmp.eq.s32.totalorder %s16, 0
      %p71 = por %p69, %p70
      %p72 = scmp.ne.s32.totalorder %s64, %s66
      %p73 = scmp.eq.s32.totalorder %s21, 1
      %p74 = por %p72, %p73
      %p75 = scmp.ne.s32.totalorder %s66, %s67
      %p76 = scmp.eq.s32.totalorder %s21, 0
      %p77 = por %p75, %p76
      %p78 = scmp.ne.s32.totalorder %s66, %s67
      %p79 = scmp.eq.s32.totalorder %s22, 1
      %p80 = por %p78, %p79
      %p82 = scmp.ne.s32.totalorder %s67, %s81
      %p83 = scmp.eq.s32.totalorder %s22, 0
      %p84 = por %p82, %p83
      %s86 = sadd.s32 %s85, 1
      %p89 = scmp.eq.s32.totalorder %s16, 1
      %p90 = scmp.ne.s32.totalorder %s85, %s87
      %p91 = scmp.eq.s32.totalorder %s16, 0
      %p92 = por %p90, %p91
      %p93 = scmp.ne.s32.totalorder %s85, %s87
      %p94 = scmp.eq.s32.totalorder %s21, 1
      %p95 = por %p93, %p94
      %p96 = scmp.ne.s32.totalorder %s87, %s88
      %p97 = scmp.eq.s32.totalorder %s21, 0
      %p98 = por %p96, %p97
      %p99 = scmp.ne.s32.totalorder %s87, %s88
      %p100 = scmp.eq.s32.totalorder %s22, 1
      %p101 = por %p99, %p100
      %p103 = scmp.ne.s32.totalorder %s88, %s102
      %p104 = scmp.eq.s32.totalorder %s22, 0
      %p105 = por %p103, %p104
      %s106 = ssub.s32 %s23, %s35
      %p107 = scmp.eq.s32.totalorder %s106, 0
      %s109 = sadd.s32 %s108, 1
      %s110 = scalar_select %p107, %s108, %s109
      %p113 = pneg %p107
      %p114 = scmp.eq.s32.totalorder %s16, 1
      %p115 = por %p113, %p114
      %p116 = scmp.ne.s32.totalorder %s108, %s111
      %p117 = scmp.eq.s32.totalorder %s16, 0
      %p118 = por %p116, %p117
      %p119 = scmp.ne.s32.totalorder %s108, %s111
      %p120 = scmp.eq.s32.totalorder %s21, 1
      %p121 = por %p119, %p120
      %p122 = scmp.ne.s32.totalorder %s111, %s112
      %p123 = scmp.eq.s32.totalorder %s21, 0
      %p124 = por %p122, %p123
      %p125 = scmp.ne.s32.totalorder %s111, %s112
      %p126 = scmp.eq.s32.totalorder %s22, 1
      %p127 = por %p125, %p126
      %p129 = scmp.ne.s32.totalorder %s112, %s128
      %p130 = scmp.eq.s32.totalorder %s22, 0
      %p131 = por %p129, %p130
      %p132 = scmp.le.s32.totalorder 1, %s16
      %p133 = scmp.lt.s32.totalorder %s16, 3
      %p134 = pnand %p132, %p133
      %p135 = pneg %p134
      // Predicated region
      $region9: #{tpu_custom_call.1} parent=5 // pred_check
        _
      $region10: #{tpu_custom_call.1} parent=5 // pred_check_branch
        %137 = sbr.rel (%p134) target = $region12
      $region11: #{tpu_custom_call.1} parent=5 // pred_region
        %s138 = ssub.s32 %s16, 1
        // Predicated region
        $region13: #{tpu_custom_call.1} parent=11 // pred_check
          %p139 = pneg %p77
        $region14: #{tpu_custom_call.1} parent=11 // pred_check_branch
          %141 = sbr.rel (%p139) target = $region16
        $region15: #{tpu_custom_call.1} parent=11 // pred_region
          %s143 = ssub.s32 1792, 1792
          %144 = vsyncadd [#allocation8], %s143
          %s145 = sshll.u32 [#allocation7], 4
          %s146 = int_to_ptr.vmem [resolvable:$true] %s145
          %151 = dma.hbm_to_vmem [thread:$0]  %s1, 1792, %s146, [#allocation8], 128, 128, 8
        $region16: #{tpu_custom_call.1} parent=11 // pred_fallthru
          _
        // Predicated region
        $region17: #{tpu_custom_call.1} parent=11 // pred_check
          %p152 = pneg %p98
        $region18: #{tpu_custom_call.1} parent=11 // pred_check_branch
          %154 = sbr.rel (%p152) target = $region20
        $region19: #{tpu_custom_call.1} parent=11 // pred_region
          %s156 = ssub.s32 3584, 3584
          %157 = vsyncadd [#allocation8], %s156
          %s158 = sshll.u32 [#allocation9], 4
          %s159 = int_to_ptr.vmem [resolvable:$true] %s158
          %164 = dma.hbm_to_vmem [thread:$0]  %s2, 3584, %s159, [#allocation8], 128, 128, 8
        $region20: #{tpu_custom_call.1} parent=11 // pred_fallthru
          _
      $region12: #{tpu_custom_call.1} parent=5 // pred_fallthru
        _
      %p165 = scmp.lt.s32.totalorder %s16, 2
      // Predicated region
      $region21: #{tpu_custom_call.1} parent=5 // pred_check
        %p166 = pneg %p165
      $region22: #{tpu_custom_call.1} parent=5 // pred_check_branch
        %168 = sbr.rel (%p166) target = $region24
      $region23: #{tpu_custom_call.1} parent=5 // pred_region
        // Predicated region
        $region25: #{tpu_custom_call.1} parent=23 // pred_check
          %p169 = pneg %p50
        $region26: #{tpu_custom_call.1} parent=23 // pred_check_branch
          %171 = sbr.rel (%p169) target = $region28
        $region27: #{tpu_custom_call.1} parent=23 // pred_region
          %s172 = sand.u32 %s40, 1
          %s173 = scalar_lea.sflag [#allocation5], %s172
          %s174 = sand.u32 %s40, 1
          %s175 = smul.addr %s174, 64
          %s176 = scalar_lea.vmem [#allocation4], %s175
          %s177 = smul.u32 4, %s24
          %s179 = ssub.s32 1024, 1024
          %180 = vsyncadd %s173, %s179
          %s181 = smul.addr %s177, 2
          %s182 = smul.addr %s23, 8
          %s183 = sadd.s32 %s181, %s182
          %s184 = smul.addr %s183, 128
          %s185 = scalar_lea.hbm %s0, %s184
          %s186 = sshll.u32 %s176, 4
          %s187 = int_to_ptr.vmem [resolvable:$true] %s186
          %192 = dma.hbm_to_vmem [thread:$0]  %s185, 1024, %s187, %s173, 128, 128, 8
        $region28: #{tpu_custom_call.1} parent=23 // pred_fallthru
          _
      $region24: #{tpu_custom_call.1} parent=5 // pred_fallthru
        _
      %p193 = scmp.le.s32.totalorder 1, %s16
      %p194 = scmp.lt.s32.totalorder %s16, 3
      %p195 = pnand %p193, %p194
      %p196 = pneg %p195
      // Predicated region
      $region29: #{tpu_custom_call.1} parent=5 // pred_check
        _
      $region30: #{tpu_custom_call.1} parent=5 // pred_check_branch
        %198 = sbr.rel (%p195) target = $region32
      $region31: #{tpu_custom_call.1} parent=5 // pred_region
        %s199 = ssub.s32 %s16, 1
        %s200 = sand.u32 %s43, 1
        %s201 = scalar_lea.sflag [#allocation5], %s200
        %s202 = sand.u32 %s43, 1
        %s203 = smul.addr %s202, 64
        %s204 = scalar_lea.vmem [#allocation4], %s203
        // Predicated region
        $region33: #{tpu_custom_call.1} parent=31 // pred_check
          %p205 = pneg %p56
        $region34: #{tpu_custom_call.1} parent=31 // pred_check_branch
          %207 = sbr.rel (%p205) target = $region36
        $region35: #{tpu_custom_call.1} parent=31 // pred_region
          %208 = dma.done %s201, 1024
        $region36: #{tpu_custom_call.1} parent=31 // pred_fallthru
          _
        // Predicated region
        $region37: #{tpu_custom_call.1} parent=31 // pred_check
          %p209 = pneg %p77
        $region38: #{tpu_custom_call.1} parent=31 // pred_check_branch
          %211 = sbr.rel (%p209) target = $region40
        $region39: #{tpu_custom_call.1} parent=31 // pred_region
          %212 = dma.done [#allocation8], 1792
        $region40: #{tpu_custom_call.1} parent=31 // pred_fallthru
          _
        // Predicated region
        $region41: #{tpu_custom_call.1} parent=31 // pred_check
          %p213 = pneg %p98
        $region42: #{tpu_custom_call.1} parent=31 // pred_check_branch
          %215 = sbr.rel (%p213) target = $region44
        $region43: #{tpu_custom_call.1} parent=31 // pred_region
          %216 = dma.done [#allocation8], 3584
        $region44: #{tpu_custom_call.1} parent=31 // pred_fallthru
          _
        %s217 = sand.u32 %s43, 1
        %s218 = scalar_lea.sflag [#allocation5], %s217
        %s219 = sand.u32 %s43, 1
        %s220 = smul.addr %s219, 64
        %s221 = scalar_lea.vmem [#allocation4], %s220
        %p222 = pneg %p56
        %p223 = pneg %p53
        %p224 = pneg %p77
        %p225 = pneg %p74
        %p226 = pneg %p98
        %p227 = pneg %p95
        %p228 = pneg %p124
        %p229 = pneg %p121
        %s230 = sand.u32 %s111, 1
        %s231 = scalar_lea.sflag [#allocation6], %s230
        %s232 = sand.u32 %s111, 1
        %s233 = smul.addr %s232, 16
        %s234 = scalar_lea.vmem [#allocation10], %s233
        %s235 = smul.u32 4, %s26
        %p236 = scmp.eq.s32.totalorder %s26, 0
        // Predicated region
        $region45: #{tpu_custom_call.1} parent=31 // pred_check
          %p237 = pneg %p236
        $region46: #{tpu_custom_call.1} parent=31 // pred_check_branch
          %239 = sbr.rel (%p237) target = $region48
        $region47: #{tpu_custom_call.1} parent=31 // pred_region
          %vm240 = vcmask 130048
          %241 = vst.msk [vmem:[#allocation2] sm:$0xff] %vm240, 0.0
          %242 = vst.msk [vmem:[#allocation2 + $0x8] sm:$0xff] %vm240, 0.0
          %243 = vst.msk [vmem:[#allocation3] sm:$0xff] %vm240, -inf
          %244 = vst.msk [vmem:[#allocation3 + $0x8] sm:$0xff] %vm240, -inf
        $region48: #{tpu_custom_call.1} parent=31 // pred_fallthru
          _
        %v245 = vld [vmem:[%s204] sm:$0xff]
        %v246 = vld [vmem:[%s204 + $0x8] sm:$0xff]
        %v247 = vadd.f32 %v245, 0.0
        %v248 = vadd.f32 %v246, 0.0
        %s249 = scalar_lea.vmem %s204, 16 [#allocation4]
        %v250 = vld [vmem:[%s249] sm:$0xff]
        %v251 = vld [vmem:[%s249 + $0x8] sm:$0xff]
        %v252 = vadd.f32 %v247, %v250
        %v253 = vadd.f32 %v248, %v251
        %v254 = vmax.f32 %v245, %v250
        %v255 = vmax.f32 %v246, %v251
        %s256 = scalar_lea.vmem %s204, 32 [#allocation4]
        %v257 = vld [vmem:[%s256] sm:$0xff]
        %v258 = vld [vmem:[%s256 + $0x8] sm:$0xff]
        %v259 = vadd.f32 %v252, %v257
        %v260 = vadd.f32 %v253, %v258
        %v261 = vmax.f32 %v254, %v257
        %v262 = vmax.f32 %v255, %v258
        %s263 = scalar_lea.vmem %s204, 48 [#allocation4]
        %v264 = vld [vmem:[%s263] sm:$0xff]
        %v265 = vld [vmem:[%s263 + $0x8] sm:$0xff]
        %v266 = vadd.f32 %v259, %v264
        %v267 = vadd.f32 %v260, %v265
        %v268 = vmax.f32 %v261, %v264
        %v269 = vmax.f32 %v262, %v265
        %v270 = vld [vmem:[#allocation2] sm:$0xff]
        %v271 = vld [vmem:[#allocation2 + $0x8] sm:$0xff]
        %v272 = vadd.f32 %v270, %v266
        %v273 = vadd.f32 %v271, %v267
        %vm274 = vcmask 130048
        %275 = vst.msk [vmem:[#allocation2] sm:$0xff] %vm274, %v272
        %276 = vst.msk [vmem:[#allocation2 + $0x8] sm:$0xff] %vm274, %v273
        %v277 = vld [vmem:[#allocation3] sm:$0xff]
        %v278 = vld [vmem:[#allocation3 + $0x8] sm:$0xff]
        %v279 = vmax.f32 %v277, %v268
        %v280 = vmax.f32 %v278, %v269
        %281 = vst.msk [vmem:[#allocation3] sm:$0xff] %vm274, %v279
        %282 = vst.msk [vmem:[#allocation3 + $0x8] sm:$0xff] %vm274, %v280
        // Predicated region
        $region49: #{tpu_custom_call.1} parent=31 // pred_check
          %p283 = pneg %p236
        $region50: #{tpu_custom_call.1} parent=31 // pred_check_branch
          %285 = sbr.rel (%p283) target = $region52
        $region51: #{tpu_custom_call.1} parent=31 // pred_region
          %v286 = vld [vmem:[#allocation2] sm:$0xff]
          %v287 = vld [vmem:[#allocation2 + $0x8] sm:$0xff]
          %v288 = vmul.f32 %v286, 0.25
          %v289 = vmul.f32 %v287, 0.25
          %v290 = vld [vmem:[#allocation3] sm:$0xff]
          %v291 = vld [vmem:[#allocation3 + $0x8] sm:$0xff]
          %v292 = vld [vmem:[#allocation9] sm:$0xff]
          %v293 = vld [vmem:[#allocation9 + $0x8] sm:$0xff]
          %s294 = scalar_lea.vmem [#allocation9], 112
          %v295 = vld [vmem:[%s294] sm:$0xff]
          %v296 = vld [vmem:[%s294 + $0x8] sm:$0xff]
          %v298 = vsel %vm274, %v290, 0
          %v301 = vsel %vm274, %v291, 0
          %303 = vmatprep.subr.mxu0 0.0
          %304 = vmatpush1.msra.mxu0 %v295
          %305 = vmatprep.subr.mxu0 0.0
          %306 = vmatpush1.msra.mxu0 %v296
          %307 = vmatprep.subr.mxu0 0.0
          %308 = vmatpush1.msra.mxu0 0.0
          %309 = vmatprep.subr.mxu0 0.0
          %310 = vmatpush1.msra.mxu0 0.0
          %311 = vmatprep.subr.mxu0 0.0
          %312 = vmatpush1.msra.mxu0 0.0
          %313 = vmatprep.subr.mxu0 0.0
          %314 = vmatpush1.msra.mxu0 0.0
          %315 = vmatprep.subr.mxu0 0.0
          %316 = vmatpush1.msra.mxu0 0.0
          %317 = vmatprep.subr.mxu0 0.0
          %318 = vmatpush1.msra.mxu0 0.0
          %319 = vmatprep.subr.mxu0 0.0
          %320 = vmatpush1.msra.mxu0 0.0
          %321 = vmatprep.subr.mxu0 0.0
          %322 = vmatpush1.msra.mxu0 0.0
          %323 = vmatprep.subr.mxu0 0.0
          %324 = vmatpush1.msra.mxu0 0.0
          %325 = vmatprep.subr.mxu0 0.0
          %326 = vmatpush1.msra.mxu0 0.0
          %327 = vmatprep.subr.mxu0 0.0
          %328 = vmatpush1.msra.mxu0 0.0
          %329 = vmatprep.subr.mxu0 0.0
          %330 = vmatpush1.msra.mxu0 0.0
          %331 = vmatprep.subr.mxu0 0.0
          %332 = vmatpush1.msra.mxu0 0.0
          %333 = vmatprep.subr.mxu0 0.0
          %334 = vmatpush1.msra.mxu0 0.0
          %335 = vmatprep.subr.mxu0 0.0
          %336 = vmatpush1.msra.mxu0 0.0
          %337 = vmatprep.subr.mxu0 0.0
          %338 = vmatpush1.msra.mxu0 0.0
          %339 = vmatprep.subr.mxu0 0.0
          %340 = vmatpush1.msra.mxu0 0.0
          %341 = vmatprep.subr.mxu0 0.0
          %342 = vmatpush1.msra.mxu0 0.0
          %343 = vmatprep.subr.mxu0 0.0
          %344 = vmatpush1.msra.mxu0 0.0
          %345 = vmatprep.subr.mxu0 0.0
          %346 = vmatpush1.msra.mxu0 0.0
          %347 = vmatprep.subr.mxu0 0.0
          %348 = vmatpush1.msra.mxu0 0.0
          %349 = vmatprep.subr.mxu0 0.0
          %350 = vmatpush1.msra.mxu0 0.0
          %351 = vmatprep.subr.mxu0 0.0
          %352 = vmatpush1.msra.mxu0 0.0
          %353 = vmatprep.subr.mxu0 0.0
          %354 = vmatpush1.msra.mxu0 0.0
          %355 = vmatprep.subr.mxu0 0.0
          %356 = vmatpush1.msra.mxu0 0.0
          %357 = vmatprep.subr.mxu0 0.0
          %358 = vmatpush1.msra.mxu0 0.0
          %359 = vmatprep.subr.mxu0 0.0
          %360 = vmatpush1.msra.mxu0 0.0
          %361 = vmatprep.subr.mxu0 0.0
          %362 = vmatpush1.msra.mxu0 0.0
          %363 = vmatprep.subr.mxu0 0.0
          %364 = vmatpush1.msra.mxu0 0.0
          %365 = vmatprep.subr.mxu0 0.0
          %366 = vmatpush1.msra.mxu0 0.0
          %367 = vmatprep.mubr.f32.mxu0 0.0
          %368 = vmatmul.mubr.f32.gmra.mrb[0].mxu0 %v298
          %v369 = vpop.f32.mrb[0].mxu0
          %v370 = vadd.f32 0.0, %v369
          %v371 = vpop.f32.mrb[0].mxu0
          %372 = vmatprep.mubr.f32.mxu0 0.0
          %373 = vmatmul.mubr.f32.gmra.mrb[0].mxu0 %v301
          %v374 = vpop.f32.mrb[0].mxu0
          %v375 = vadd.f32 0.0, %v374
          %v376 = vpop.f32.mrb[0].mxu0
          %377 = vdwg.mxu0
          %v379 = vsel %vm274, %v288, 0
          %v382 = vsel %vm274, %v289, 0
          %384 = vmatprep.subr.mxu0 0.0
          %385 = vmatpush1.msra.mxu0 %v292
          %386 = vmatprep.subr.mxu0 0.0
          %387 = vmatpush1.msra.mxu0 %v293
          %388 = vmatprep.subr.mxu0 0.0
          %389 = vmatpush1.msra.mxu0 0.0
          %390 = vmatprep.subr.mxu0 0.0
          %391 = vmatpush1.msra.mxu0 0.0
          %392 = vmatprep.subr.mxu0 0.0
          %393 = vmatpush1.msra.mxu0 0.0
          %394 = vmatprep.subr.mxu0 0.0
          %395 = vmatpush1.msra.mxu0 0.0
          %396 = vmatprep.subr.mxu0 0.0
          %397 = vmatpush1.msra.mxu0 0.0
          %398 = vmatprep.subr.mxu0 0.0
          %399 = vmatpush1.msra.mxu0 0.0
          %400 = vmatprep.subr.mxu0 0.0
          %401 = vmatpush1.msra.mxu0 0.0
          %402 = vmatprep.subr.mxu0 0.0
          %403 = vmatpush1.msra.mxu0 0.0
          %404 = vmatprep.subr.mxu0 0.0
          %405 = vmatpush1.msra.mxu0 0.0
          %406 = vmatprep.subr.mxu0 0.0
          %407 = vmatpush1.msra.mxu0 0.0
          %408 = vmatprep.subr.mxu0 0.0
          %409 = vmatpush1.msra.mxu0 0.0
          %410 = vmatprep.subr.mxu0 0.0
          %411 = vmatpush1.msra.mxu0 0.0
          %412 = vmatprep.subr.mxu0 0.0
          %413 = vmatpush1.msra.mxu0 0.0
          %414 = vmatprep.subr.mxu0 0.0
          %415 = vmatpush1.msra.mxu0 0.0
          %416 = vmatprep.subr.mxu0 0.0
          %417 = vmatpush1.msra.mxu0 0.0
          %418 = vmatprep.subr.mxu0 0.0
          %419 = vmatpush1.msra.mxu0 0.0
          %420 = vmatprep.subr.mxu0 0.0
          %421 = vmatpush1.msra.mxu0 0.0
          %422 = vmatprep.subr.mxu0 0.0
          %423 = vmatpush1.msra.mxu0 0.0
          %424 = vmatprep.subr.mxu0 0.0
          %425 = vmatpush1.msra.mxu0 0.0
          %426 = vmatprep.subr.mxu0 0.0
          %427 = vmatpush1.msra.mxu0 0.0
          %428 = vmatprep.subr.mxu0 0.0
          %429 = vmatpush1.msra.mxu0 0.0
          %430 = vmatprep.subr.mxu0 0.0
          %431 = vmatpush1.msra.mxu0 0.0
          %432 = vmatprep.subr.mxu0 0.0
          %433 = vmatpush1.msra.mxu0 0.0
          %434 = vmatprep.subr.mxu0 0.0
          %435 = vmatpush1.msra.mxu0 0.0
          %436 = vmatprep.subr.mxu0 0.0
          %437 = vmatpush1.msra.mxu0 0.0
          %438 = vmatprep.subr.mxu0 0.0
          %439 = vmatpush1.msra.mxu0 0.0
          %440 = vmatprep.subr.mxu0 0.0
          %441 = vmatpush1.msra.mxu0 0.0
          %442 = vmatprep.subr.mxu0 0.0
          %443 = vmatpush1.msra.mxu0 0.0
          %444 = vmatprep.subr.mxu0 0.0
          %445 = vmatpush1.msra.mxu0 0.0
          %446 = vmatprep.subr.mxu0 0.0
          %447 = vmatpush1.msra.mxu0 0.0
          %448 = vmatprep.mubr.f32.mxu0 0.0
          %449 = vmatmul.mubr.f32.gmra.mrb[0].mxu0 %v379
          %v450 = vpop.f32.mrb[0].mxu0
          %v451 = vadd.f32 %v370, %v450
          %v452 = vpop.f32.mrb[0].mxu0
          %453 = vmatprep.mubr.f32.mxu0 0.0
          %454 = vmatmul.mubr.f32.gmra.mrb[0].mxu0 %v382
          %v455 = vpop.f32.mrb[0].mxu0
          %v456 = vadd.f32 %v375, %v455
          %v457 = vpop.f32.mrb[0].mxu0
          %458 = vdwg.mxu0
          %v459 = vld [vmem:[#allocation7] sm:$0xff]
          %v460 = vld [vmem:[#allocation7 + $0x8] sm:$0xff]
          %s461 = scalar_lea.vmem [#allocation9], 16
          %v462 = vld [vmem:[%s461] sm:$0xff]
          %v463 = vld [vmem:[%s461 + $0x8] sm:$0xff]
          %s464 = scalar_lea.vmem [#allocation9], 128
          %v465 = vld [vmem:[%s464] sm:$0xff]
          %v466 = vld [vmem:[%s464 + $0x8] sm:$0xff]
          %467 = vmatprep.subr.mxu0 0.0
          %468 = vmatpush1.msra.mxu0 %v465
          %469 = vmatprep.subr.mxu0 0.0
          %470 = vmatpush1.msra.mxu0 %v466
          %471 = vmatprep.subr.mxu0 0.0
          %472 = vmatpush1.msra.mxu0 0.0
          %473 = vmatprep.subr.mxu0 0.0
          %474 = vmatpush1.msra.mxu0 0.0
          %475 = vmatprep.subr.mxu0 0.0
          %476 = vmatpush1.msra.mxu0 0.0
          %477 = vmatprep.subr.mxu0 0.0
          %478 = vmatpush1.msra.mxu0 0.0
          %479 = vmatprep.subr.mxu0 0.0
          %480 = vmatpush1.msra.mxu0 0.0
          %481 = vmatprep.subr.mxu0 0.0
          %482 = vmatpush1.msra.mxu0 0.0
          %483 = vmatprep.subr.mxu0 0.0
          %484 = vmatpush1.msra.mxu0 0.0
          %485 = vmatprep.subr.mxu0 0.0
          %486 = vmatpush1.msra.mxu0 0.0
          %487 = vmatprep.subr.mxu0 0.0
          %488 = vmatpush1.msra.mxu0 0.0
          %489 = vmatprep.subr.mxu0 0.0
          %490 = vmatpush1.msra.mxu0 0.0
          %491 = vmatprep.subr.mxu0 0.0
          %492 = vmatpush1.msra.mxu0 0.0
          %493 = vmatprep.subr.mxu0 0.0
          %494 = vmatpush1.msra.mxu0 0.0
          %495 = vmatprep.subr.mxu0 0.0
          %496 = vmatpush1.msra.mxu0 0.0
          %497 = vmatprep.subr.mxu0 0.0
          %498 = vmatpush1.msra.mxu0 0.0
          %499 = vmatprep.subr.mxu0 0.0
          %500 = vmatpush1.msra.mxu0 0.0
          %501 = vmatprep.subr.mxu0 0.0
          %502 = vmatpush1.msra.mxu0 0.0
          %503 = vmatprep.subr.mxu0 0.0
          %504 = vmatpush1.msra.mxu0 0.0
          %505 = vmatprep.subr.mxu0 0.0
          %506 = vmatpush1.msra.mxu0 0.0
          %507 = vmatprep.subr.mxu0 0.0
          %508 = vmatpush1.msra.mxu0 0.0
          %509 = vmatprep.subr.mxu0 0.0
          %510 = vmatpush1.msra.mxu0 0.0
          %511 = vmatprep.subr.mxu0 0.0
          %512 = vmatpush1.msra.mxu0 0.0
          %513 = vmatprep.subr.mxu0 0.0
          %514 = vmatpush1.msra.mxu0 0.0
          %515 = vmatprep.subr.mxu0 0.0
          %516 = vmatpush1.msra.mxu0 0.0
          %517 = vmatprep.subr.mxu0 0.0
          %518 = vmatpush1.msra.mxu0 0.0
          %519 = vmatprep.subr.mxu0 0.0
          %520 = vmatpush1.msra.mxu0 0.0
          %521 = vmatprep.subr.mxu0 0.0
          %522 = vmatpush1.msra.mxu0 0.0
          %523 = vmatprep.subr.mxu0 0.0
          %524 = vmatpush1.msra.mxu0 0.0
          %525 = vmatprep.subr.mxu0 0.0
          %526 = vmatpush1.msra.mxu0 0.0
          %527 = vmatprep.subr.mxu0 0.0
          %528 = vmatpush1.msra.mxu0 0.0
          %529 = vmatprep.subr.mxu0 0.0
          %530 = vmatpush1.msra.mxu0 0.0
          %531 = vmatprep.mubr.f32.mxu0 0.0
          %532 = vmatmul.mubr.f32.gmra.mrb[0].mxu0 %v298
          %v533 = vpop.f32.mrb[0].mxu0
          %v534 = vadd.f32 0.0, %v533
          %v535 = vpop.f32.mrb[0].mxu0
          %536 = vmatprep.mubr.f32.mxu0 0.0
          %537 = vmatmul.mubr.f32.gmra.mrb[0].mxu0 %v301
          %v538 = vpop.f32.mrb[0].mxu0
          %v539 = vadd.f32 0.0, %v538
          %v540 = vpop.f32.mrb[0].mxu0
          %541 = vdwg.mxu0
          %542 = vmatprep.subr.mxu0 0.0
          %543 = vmatpush1.msra.mxu0 %v462
          %544 = vmatprep.subr.mxu0 0.0
          %545 = vmatpush1.msra.mxu0 %v463
          %546 = vmatprep.subr.mxu0 0.0
          %547 = vmatpush1.msra.mxu0 0.0
          %548 = vmatprep.subr.mxu0 0.0
          %549 = vmatpush1.msra.mxu0 0.0
          %550 = vmatprep.subr.mxu0 0.0
          %551 = vmatpush1.msra.mxu0 0.0
          %552 = vmatprep.subr.mxu0 0.0
          %553 = vmatpush1.msra.mxu0 0.0
          %554 = vmatprep.subr.mxu0 0.0
          %555 = vmatpush1.msra.mxu0 0.0
          %556 = vmatprep.subr.mxu0 0.0
          %557 = vmatpush1.msra.mxu0 0.0
          %558 = vmatprep.subr.mxu0 0.0
          %559 = vmatpush1.msra.mxu0 0.0
          %560 = vmatprep.subr.mxu0 0.0
          %561 = vmatpush1.msra.mxu0 0.0
          %562 = vmatprep.subr.mxu0 0.0
          %563 = vmatpush1.msra.mxu0 0.0
          %564 = vmatprep.subr.mxu0 0.0
          %565 = vmatpush1.msra.mxu0 0.0
          %566 = vmatprep.subr.mxu0 0.0
          %567 = vmatpush1.msra.mxu0 0.0
          %568 = vmatprep.subr.mxu0 0.0
          %569 = vmatpush1.msra.mxu0 0.0
          %570 = vmatprep.subr.mxu0 0.0
          %571 = vmatpush1.msra.mxu0 0.0
          %572 = vmatprep.subr.mxu0 0.0
          %573 = vmatpush1.msra.mxu0 0.0
          %574 = vmatprep.subr.mxu0 0.0
          %575 = vmatpush1.msra.mxu0 0.0
          %576 = vmatprep.subr.mxu0 0.0
          %577 = vmatpush1.msra.mxu0 0.0
          %578 = vmatprep.subr.mxu0 0.0
          %579 = vmatpush1.msra.mxu0 0.0
          %580 = vmatprep.subr.mxu0 0.0
          %581 = vmatpush1.msra.mxu0 0.0
          %582 = vmatprep.subr.mxu0 0.0
          %583 = vmatpush1.msra.mxu0 0.0
          %584 = vmatprep.subr.mxu0 0.0
          %585 = vmatpush1.msra.mxu0 0.0
          %586 = vmatprep.subr.mxu0 0.0
          %587 = vmatpush1.msra.mxu0 0.0
          %588 = vmatprep.subr.mxu0 0.0
          %589 = vmatpush1.msra.mxu0 0.0
          %590 = vmatprep.subr.mxu0 0.0
          %591 = vmatpush1.msra.mxu0 0.0
          %592 = vmatprep.subr.mxu0 0.0
          %593 = vmatpush1.msra.mxu0 0.0
          %594 = vmatprep.subr.mxu0 0.0
          %595 = vmatpush1.msra.mxu0 0.0
          %596 = vmatprep.subr.mxu0 0.0
          %597 = vmatpush1.msra.mxu0 0.0
          %598 = vmatprep.subr.mxu0 0.0
          %599 = vmatpush1.msra.mxu0 0.0
          %600 = vmatprep.subr.mxu0 0.0
          %601 = vmatpush1.msra.mxu0 0.0
          %602 = vmatprep.subr.mxu0 0.0
          %603 = vmatpush1.msra.mxu0 0.0
          %604 = vmatprep.subr.mxu0 0.0
          %605 = vmatpush1.msra.mxu0 0.0
          %606 = vmatprep.mubr.f32.mxu0 0.0
          %607 = vmatmul.mubr.f32.gmra.mrb[0].mxu0 %v379
          %v608 = vpop.f32.mrb[0].mxu0
          %v609 = vadd.f32 %v534, %v608
          %v610 = vpop.f32.mrb[0].mxu0
          %611 = vmatprep.mubr.f32.mxu0 0.0
          %612 = vmatmul.mubr.f32.gmra.mrb[0].mxu0 %v382
          %v613 = vpop.f32.mrb[0].mxu0
          %v614 = vadd.f32 %v539, %v613
          %v615 = vpop.f32.mrb[0].mxu0
          %616 = vdwg.mxu0
          %s617 = scalar_lea.vmem [#allocation7], 16
          %v618 = vld [vmem:[%s617] sm:$0xff]
          %v619 = vld [vmem:[%s617 + $0x8] sm:$0xff]
          %v621 = vsel %vm274, %v618, 0
          %v624 = vsel %vm274, %v619, 0
          %626 = vmatprep.subr.mxu0 0.0
          %627 = vmatpush1.msra.mxu0 %v609
          %628 = vmatprep.subr.mxu0 0.0
          %629 = vmatpush1.msra.mxu0 %v614
          %630 = vmatprep.subr.mxu0 0.0
          %631 = vmatpush1.msra.mxu0 0.0
          %632 = vmatprep.subr.mxu0 0.0
          %633 = vmatpush1.msra.mxu0 0.0
          %634 = vmatprep.subr.mxu0 0.0
          %635 = vmatpush1.msra.mxu0 0.0
          %636 = vmatprep.subr.mxu0 0.0
          %637 = vmatpush1.msra.mxu0 0.0
          %638 = vmatprep.subr.mxu0 0.0
          %639 = vmatpush1.msra.mxu0 0.0
          %640 = vmatprep.subr.mxu0 0.0
          %641 = vmatpush1.msra.mxu0 0.0
          %642 = vmatprep.subr.mxu0 0.0
          %643 = vmatpush1.msra.mxu0 0.0
          %644 = vmatprep.subr.mxu0 0.0
          %645 = vmatpush1.msra.mxu0 0.0
          %646 = vmatprep.subr.mxu0 0.0
          %647 = vmatpush1.msra.mxu0 0.0
          %648 = vmatprep.subr.mxu0 0.0
          %649 = vmatpush1.msra.mxu0 0.0
          %650 = vmatprep.subr.mxu0 0.0
          %651 = vmatpush1.msra.mxu0 0.0
          %652 = vmatprep.subr.mxu0 0.0
          %653 = vmatpush1.msra.mxu0 0.0
          %654 = vmatprep.subr.mxu0 0.0
          %655 = vmatpush1.msra.mxu0 0.0
          %656 = vmatprep.subr.mxu0 0.0
          %657 = vmatpush1.msra.mxu0 0.0
          %658 = vmatprep.subr.mxu0 0.0
          %659 = vmatpush1.msra.mxu0 0.0
          %660 = vmatprep.subr.mxu0 0.0
          %661 = vmatpush1.msra.mxu0 0.0
          %662 = vmatprep.subr.mxu0 0.0
          %663 = vmatpush1.msra.mxu0 0.0
          %664 = vmatprep.subr.mxu0 0.0
          %665 = vmatpush1.msra.mxu0 0.0
          %666 = vmatprep.subr.mxu0 0.0
          %667 = vmatpush1.msra.mxu0 0.0
          %668 = vmatprep.subr.mxu0 0.0
          %669 = vmatpush1.msra.mxu0 0.0
          %670 = vmatprep.subr.mxu0 0.0
          %671 = vmatpush1.msra.mxu0 0.0
          %672 = vmatprep.subr.mxu0 0.0
          %673 = vmatpush1.msra.mxu0 0.0
          %674 = vmatprep.subr.mxu0 0.0
          %675 = vmatpush1.msra.mxu0 0.0
          %676 = vmatprep.subr.mxu0 0.0
          %677 = vmatpush1.msra.mxu0 0.0
          %678 = vmatprep.subr.mxu0 0.0
          %679 = vmatpush1.msra.mxu0 0.0
          %680 = vmatprep.subr.mxu0 0.0
          %681 = vmatpush1.msra.mxu0 0.0
          %682 = vmatprep.subr.mxu0 0.0
          %683 = vmatpush1.msra.mxu0 0.0
          %684 = vmatprep.subr.mxu0 0.0
          %685 = vmatpush1.msra.mxu0 0.0
          %686 = vmatprep.subr.mxu0 0.0
          %687 = vmatpush1.msra.mxu0 0.0
          %688 = vmatprep.subr.mxu0 0.0
          %689 = vmatpush1.msra.mxu0 0.0
          %690 = vmatprep.mubr.f32.mxu0 0.0
          %691 = vmatmul.mubr.f32.gmra.mrb[0].mxu0 %v621
          %v692 = vpop.f32.mrb[0].mxu0
          %v693 = vadd.f32 0.0, %v692
          %v694 = vpop.f32.mrb[0].mxu0
          %695 = vmatprep.mubr.f32.mxu0 0.0
          %696 = vmatmul.mubr.f32.gmra.mrb[0].mxu0 %v624
          %v697 = vpop.f32.mrb[0].mxu0
          %v698 = vadd.f32 0.0, %v697
          %v699 = vpop.f32.mrb[0].mxu0
          %700 = vdwg.mxu0
          %v702 = vsel %vm274, %v459, 0
          %v705 = vsel %vm274, %v460, 0
          %707 = vmatprep.subr.mxu0 0.0
          %708 = vmatpush1.msra.mxu0 %v451
          %709 = vmatprep.subr.mxu0 0.0
          %710 = vmatpush1.msra.mxu0 %v456
          %711 = vmatprep.subr.mxu0 0.0
          %712 = vmatpush1.msra.mxu0 0.0
          %713 = vmatprep.subr.mxu0 0.0
          %714 = vmatpush1.msra.mxu0 0.0
          %715 = vmatprep.subr.mxu0 0.0
          %716 = vmatpush1.msra.mxu0 0.0
          %717 = vmatprep.subr.mxu0 0.0
          %718 = vmatpush1.msra.mxu0 0.0
          %719 = vmatprep.subr.mxu0 0.0
          %720 = vmatpush1.msra.mxu0 0.0
          %721 = vmatprep.subr.mxu0 0.0
          %722 = vmatpush1.msra.mxu0 0.0
          %723 = vmatprep.subr.mxu0 0.0
          %724 = vmatpush1.msra.mxu0 0.0
          %725 = vmatprep.subr.mxu0 0.0
          %726 = vmatpush1.msra.mxu0 0.0
          %727 = vmatprep.subr.mxu0 0.0
          %728 = vmatpush1.msra.mxu0 0.0
          %729 = vmatprep.subr.mxu0 0.0
          %730 = vmatpush1.msra.mxu0 0.0
          %731 = vmatprep.subr.mxu0 0.0
          %732 = vmatpush1.msra.mxu0 0.0
          %733 = vmatprep.subr.mxu0 0.0
          %734 = vmatpush1.msra.mxu0 0.0
          %735 = vmatprep.subr.mxu0 0.0
          %736 = vmatpush1.msra.mxu0 0.0
          %737 = vmatprep.subr.mxu0 0.0
          %738 = vmatpush1.msra.mxu0 0.0
          %739 = vmatprep.subr.mxu0 0.0
          %740 = vmatpush1.msra.mxu0 0.0
          %741 = vmatprep.subr.mxu0 0.0
          %742 = vmatpush1.msra.mxu0 0.0
          %743 = vmatprep.subr.mxu0 0.0
          %744 = vmatpush1.msra.mxu0 0.0
          %745 = vmatprep.subr.mxu0 0.0
          %746 = vmatpush1.msra.mxu0 0.0
          %747 = vmatprep.subr.mxu0 0.0
          %748 = vmatpush1.msra.mxu0 0.0
          %749 = vmatprep.subr.mxu0 0.0
          %750 = vmatpush1.msra.mxu0 0.0
          %751 = vmatprep.subr.mxu0 0.0
          %752 = vmatpush1.msra.mxu0 0.0
          %753 = vmatprep.subr.mxu0 0.0
          %754 = vmatpush1.msra.mxu0 0.0
          %755 = vmatprep.subr.mxu0 0.0
          %756 = vmatpush1.msra.mxu0 0.0
          %757 = vmatprep.subr.mxu0 0.0
          %758 = vmatpush1.msra.mxu0 0.0
          %759 = vmatprep.subr.mxu0 0.0
          %760 = vmatpush1.msra.mxu0 0.0
          %761 = vmatprep.subr.mxu0 0.0
          %762 = vmatpush1.msra.mxu0 0.0
          %763 = vmatprep.subr.mxu0 0.0
          %764 = vmatpush1.msra.mxu0 0.0
          %765 = vmatprep.subr.mxu0 0.0
          %766 = vmatpush1.msra.mxu0 0.0
          %767 = vmatprep.subr.mxu0 0.0
          %768 = vmatpush1.msra.mxu0 0.0
          %769 = vmatprep.subr.mxu0 0.0
          %770 = vmatpush1.msra.mxu0 0.0
          %771 = vmatprep.mubr.f32.mxu0 0.0
          %772 = vmatmul.mubr.f32.gmra.mrb[0].mxu0 %v702
          %v773 = vpop.f32.mrb[0].mxu0
          %v774 = vadd.f32 %v693, %v773
          %v775 = vpop.f32.mrb[0].mxu0
          %776 = vmatprep.mubr.f32.mxu0 0.0
          %777 = vmatmul.mubr.f32.gmra.mrb[0].mxu0 %v705
          %v778 = vpop.f32.mrb[0].mxu0
          %v779 = vadd.f32 %v698, %v778
          %v780 = vpop.f32.mrb[0].mxu0
          %781 = vdwg.mxu0
          %s782 = scalar_lea.vmem [#allocation9], 32
          %v783 = vld [vmem:[%s782] sm:$0xff]
          %v784 = vld [vmem:[%s782 + $0x8] sm:$0xff]
          %s785 = scalar_lea.vmem [#allocation9], 144
          %v786 = vld [vmem:[%s785] sm:$0xff]
          %v787 = vld [vmem:[%s785 + $0x8] sm:$0xff]
          %788 = vmatprep.subr.mxu0 0.0
          %789 = vmatpush1.msra.mxu0 %v786
          %790 = vmatprep.subr.mxu0 0.0
          %791 = vmatpush1.msra.mxu0 %v787
          %792 = vmatprep.subr.mxu0 0.0
          %793 = vmatpush1.msra.mxu0 0.0
          %794 = vmatprep.subr.mxu0 0.0
          %795 = vmatpush1.msra.mxu0 0.0
          %796 = vmatprep.subr.mxu0 0.0
          %797 = vmatpush1.msra.mxu0 0.0
          %798 = vmatprep.subr.mxu0 0.0
          %799 = vmatpush1.msra.mxu0 0.0
          %800 = vmatprep.subr.mxu0 0.0
          %801 = vmatpush1.msra.mxu0 0.0
          %802 = vmatprep.subr.mxu0 0.0
          %803 = vmatpush1.msra.mxu0 0.0
          %804 = vmatprep.subr.mxu0 0.0
          %805 = vmatpush1.msra.mxu0 0.0
          %806 = vmatprep.subr.mxu0 0.0
          %807 = vmatpush1.msra.mxu0 0.0
          %808 = vmatprep.subr.mxu0 0.0
          %809 = vmatpush1.msra.mxu0 0.0
          %810 = vmatprep.subr.mxu0 0.0
          %811 = vmatpush1.msra.mxu0 0.0
          %812 = vmatprep.subr.mxu0 0.0
          %813 = vmatpush1.msra.mxu0 0.0
          %814 = vmatprep.subr.mxu0 0.0
          %815 = vmatpush1.msra.mxu0 0.0
          %816 = vmatprep.subr.mxu0 0.0
          %817 = vmatpush1.msra.mxu0 0.0
          %818 = vmatprep.subr.mxu0 0.0
          %819 = vmatpush1.msra.mxu0 0.0
          %820 = vmatprep.subr.mxu0 0.0
          %821 = vmatpush1.msra.mxu0 0.0
          %822 = vmatprep.subr.mxu0 0.0
          %823 = vmatpush1.msra.mxu0 0.0
          %824 = vmatprep.subr.mxu0 0.0
          %825 = vmatpush1.msra.mxu0 0.0
          %826 = vmatprep.subr.mxu0 0.0
          %827 = vmatpush1.msra.mxu0 0.0
          %828 = vmatprep.subr.mxu0 0.0
          %829 = vmatpush1.msra.mxu0 0.0
          %830 = vmatprep.subr.mxu0 0.0
          %831 = vmatpush1.msra.mxu0 0.0
          %832 = vmatprep.subr.mxu0 0.0
          %833 = vmatpush1.msra.mxu0 0.0
          %834 = vmatprep.subr.mxu0 0.0
          %835 = vmatpush1.msra.mxu0 0.0
          %836 = vmatprep.subr.mxu0 0.0
          %837 = vmatpush1.msra.mxu0 0.0
          %838 = vmatprep.subr.mxu0 0.0
          %839 = vmatpush1.msra.mxu0 0.0
          %840 = vmatprep.subr.mxu0 0.0
          %841 = vmatpush1.msra.mxu0 0.0
          %842 = vmatprep.subr.mxu0 0.0
          %843 = vmatpush1.msra.mxu0 0.0
          %844 = vmatprep.subr.mxu0 0.0
          %845 = vmatpush1.msra.mxu0 0.0
          %846 = vmatprep.subr.mxu0 0.0
          %847 = vmatpush1.msra.mxu0 0.0
          %848 = vmatprep.subr.mxu0 0.0
          %849 = vmatpush1.msra.mxu0 0.0
          %850 = vmatprep.subr.mxu0 0.0
          %851 = vmatpush1.msra.mxu0 0.0
          %852 = vmatprep.mubr.f32.mxu0 0.0
          %853 = vmatmul.mubr.f32.gmra.mrb[0].mxu0 %v298
          %v854 = vpop.f32.mrb[0].mxu0
          %v855 = vadd.f32 0.0, %v854
          %v856 = vpop.f32.mrb[0].mxu0
          %857 = vmatprep.mubr.f32.mxu0 0.0
          %858 = vmatmul.mubr.f32.gmra.mrb[0].mxu0 %v301
          %v859 = vpop.f32.mrb[0].mxu0
          %v860 = vadd.f32 0.0, %v859
          %v861 = vpop.f32.mrb[0].mxu0
          %862 = vdwg.mxu0
          %863 = vmatprep.subr.mxu0 0.0
          %864 = vmatpush1.msra.mxu0 %v783
          %865 = vmatprep.subr.mxu0 0.0
          %866 = vmatpush1.msra.mxu0 %v784
          %867 = vmatprep.subr.mxu0 0.0
          %868 = vmatpush1.msra.mxu0 0.0
          %869 = vmatprep.subr.mxu0 0.0
          %870 = vmatpush1.msra.mxu0 0.0
          %871 = vmatprep.subr.mxu0 0.0
          %872 = vmatpush1.msra.mxu0 0.0
          %873 = vmatprep.subr.mxu0 0.0
          %874 = vmatpush1.msra.mxu0 0.0
          %875 = vmatprep.subr.mxu0 0.0
          %876 = vmatpush1.msra.mxu0 0.0
          %877 = vmatprep.subr.mxu0 0.0
          %878 = vmatpush1.msra.mxu0 0.0
          %879 = vmatprep.subr.mxu0 0.0
          %880 = vmatpush1.msra.mxu0 0.0
          %881 = vmatprep.subr.mxu0 0.0
          %882 = vmatpush1.msra.mxu0 0.0
          %883 = vmatprep.subr.mxu0 0.0
          %884 = vmatpush1.msra.mxu0 0.0
          %885 = vmatprep.subr.mxu0 0.0
          %886 = vmatpush1.msra.mxu0 0.0
          %887 = vmatprep.subr.mxu0 0.0
          %888 = vmatpush1.msra.mxu0 0.0
          %889 = vmatprep.subr.mxu0 0.0
          %890 = vmatpush1.msra.mxu0 0.0
          %891 = vmatprep.subr.mxu0 0.0
          %892 = vmatpush1.msra.mxu0 0.0
          %893 = vmatprep.subr.mxu0 0.0
          %894 = vmatpush1.msra.mxu0 0.0
          %895 = vmatprep.subr.mxu0 0.0
          %896 = vmatpush1.msra.mxu0 0.0
          %897 = vmatprep.subr.mxu0 0.0
          %898 = vmatpush1.msra.mxu0 0.0
          %899 = vmatprep.subr.mxu0 0.0
          %900 = vmatpush1.msra.mxu0 0.0
          %901 = vmatprep.subr.mxu0 0.0
          %902 = vmatpush1.msra.mxu0 0.0
          %903 = vmatprep.subr.mxu0 0.0
          %904 = vmatpush1.msra.mxu0 0.0
          %905 = vmatprep.subr.mxu0 0.0
          %906 = vmatpush1.msra.mxu0 0.0
          %907 = vmatprep.subr.mxu0 0.0
          %908 = vmatpush1.msra.mxu0 0.0
          %909 = vmatprep.subr.mxu0 0.0
          %910 = vmatpush1.msra.mxu0 0.0
          %911 = vmatprep.subr.mxu0 0.0
          %912 = vmatpush1.msra.mxu0 0.0
          %913 = vmatprep.subr.mxu0 0.0
          %914 = vmatpush1.msra.mxu0 0.0
          %915 = vmatprep.subr.mxu0 0.0
          %916 = vmatpush1.msra.mxu0 0.0
          %917 = vmatprep.subr.mxu0 0.0
          %918 = vmatpush1.msra.mxu0 0.0
          %919 = vmatprep.subr.mxu0 0.0
          %920 = vmatpush1.msra.mxu0 0.0
          %921 = vmatprep.subr.mxu0 0.0
          %922 = vmatpush1.msra.mxu0 0.0
          %923 = vmatprep.subr.mxu0 0.0
          %924 = vmatpush1.msra.mxu0 0.0
          %925 = vmatprep.subr.mxu0 0.0
          %926 = vmatpush1.msra.mxu0 0.0
          %927 = vmatprep.mubr.f32.mxu0 0.0
          %928 = vmatmul.mubr.f32.gmra.mrb[0].mxu0 %v379
          %v929 = vpop.f32.mrb[0].mxu0
          %v930 = vadd.f32 %v855, %v929
          %v931 = vpop.f32.mrb[0].mxu0
          %932 = vmatprep.mubr.f32.mxu0 0.0
          %933 = vmatmul.mubr.f32.gmra.mrb[0].mxu0 %v382
          %v934 = vpop.f32.mrb[0].mxu0
          %v935 = vadd.f32 %v860, %v934
          %v936 = vpop.f32.mrb[0].mxu0
          %937 = vdwg.mxu0
          %s938 = scalar_lea.vmem [#allocation7], 32
          %v939 = vld [vmem:[%s938] sm:$0xff]
          %v940 = vld [vmem:[%s938 + $0x8] sm:$0xff]
          %v942 = vsel %vm274, %v939, 0
          %v945 = vsel %vm274, %v940, 0
          %947 = vmatprep.subr.mxu0 0.0
          %948 = vmatpush1.msra.mxu0 %v930
          %949 = vmatprep.subr.mxu0 0.0
          %950 = vmatpush1.msra.mxu0 %v935
          %951 = vmatprep.subr.mxu0 0.0
          %952 = vmatpush1.msra.mxu0 0.0
          %953 = vmatprep.subr.mxu0 0.0
          %954 = vmatpush1.msra.mxu0 0.0
          %955 = vmatprep.subr.mxu0 0.0
          %956 = vmatpush1.msra.mxu0 0.0
          %957 = vmatprep.subr.mxu0 0.0
          %958 = vmatpush1.msra.mxu0 0.0
          %959 = vmatprep.subr.mxu0 0.0
          %960 = vmatpush1.msra.mxu0 0.0
          %961 = vmatprep.subr.mxu0 0.0
          %962 = vmatpush1.msra.mxu0 0.0
          %963 = vmatprep.subr.mxu0 0.0
          %964 = vmatpush1.msra.mxu0 0.0
          %965 = vmatprep.subr.mxu0 0.0
          %966 = vmatpush1.msra.mxu0 0.0
          %967 = vmatprep.subr.mxu0 0.0
          %968 = vmatpush1.msra.mxu0 0.0
          %969 = vmatprep.subr.mxu0 0.0
          %970 = vmatpush1.msra.mxu0 0.0
          %971 = vmatprep.subr.mxu0 0.0
          %972 = vmatpush1.msra.mxu0 0.0
          %973 = vmatprep.subr.mxu0 0.0
          %974 = vmatpush1.msra.mxu0 0.0
          %975 = vmatprep.subr.mxu0 0.0
          %976 = vmatpush1.msra.mxu0 0.0
          %977 = vmatprep.subr.mxu0 0.0
          %978 = vmatpush1.msra.mxu0 0.0
          %979 = vmatprep.subr.mxu0 0.0
          %980 = vmatpush1.msra.mxu0 0.0
          %981 = vmatprep.subr.mxu0 0.0
          %982 = vmatpush1.msra.mxu0 0.0
          %983 = vmatprep.subr.mxu0 0.0
          %984 = vmatpush1.msra.mxu0 0.0
          %985 = vmatprep.subr.mxu0 0.0
          %986 = vmatpush1.msra.mxu0 0.0
          %987 = vmatprep.subr.mxu0 0.0
          %988 = vmatpush1.msra.mxu0 0.0
          %989 = vmatprep.subr.mxu0 0.0
          %990 = vmatpush1.msra.mxu0 0.0
          %991 = vmatprep.subr.mxu0 0.0
          %992 = vmatpush1.msra.mxu0 0.0
          %993 = vmatprep.subr.mxu0 0.0
          %994 = vmatpush1.msra.mxu0 0.0
          %995 = vmatprep.subr.mxu0 0.0
          %996 = vmatpush1.msra.mxu0 0.0
          %997 = vmatprep.subr.mxu0 0.0
          %998 = vmatpush1.msra.mxu0 0.0
          %999 = vmatprep.subr.mxu0 0.0
          %1000 = vmatpush1.msra.mxu0 0.0
          %1001 = vmatprep.subr.mxu0 0.0
          %1002 = vmatpush1.msra.mxu0 0.0
          %1003 = vmatprep.subr.mxu0 0.0
          %1004 = vmatpush1.msra.mxu0 0.0
          %1005 = vmatprep.subr.mxu0 0.0
          %1006 = vmatpush1.msra.mxu0 0.0
          %1007 = vmatprep.subr.mxu0 0.0
          %1008 = vmatpush1.msra.mxu0 0.0
          %1009 = vmatprep.subr.mxu0 0.0
          %1010 = vmatpush1.msra.mxu0 0.0
          %1011 = vmatprep.mubr.f32.mxu0 0.0
          %1012 = vmatmul.mubr.f32.gmra.mrb[0].mxu0 %v942
          %v1013 = vpop.f32.mrb[0].mxu0
          %v1014 = vadd.f32 0.0, %v1013
          %v1015 = vpop.f32.mrb[0].mxu0
          %1016 = vmatprep.mubr.f32.mxu0 0.0
          %1017 = vmatmul.mubr.f32.gmra.mrb[0].mxu0 %v945
          %v1018 = vpop.f32.mrb[0].mxu0
          %v1019 = vadd.f32 0.0, %v1018
          %v1020 = vpop.f32.mrb[0].mxu0
          %1021 = vdwg.mxu0
          %v1022 = vadd.f32 %v774, %v1014
          %v1023 = vadd.f32 %v779, %v1019
          %s1024 = scalar_lea.vmem [#allocation9], 48
          %v1025 = vld [vmem:[%s1024] sm:$0xff]
          %v1026 = vld [vmem:[%s1024 + $0x8] sm:$0xff]
          %s1027 = scalar_lea.vmem [#allocation9], 160
          %v1028 = vld [vmem:[%s1027] sm:$0xff]
          %v1029 = vld [vmem:[%s1027 + $0x8] sm:$0xff]
          %1030 = vmatprep.subr.mxu0 0.0
          %1031 = vmatpush1.msra.mxu0 %v1028
          %1032 = vmatprep.subr.mxu0 0.0
          %1033 = vmatpush1.msra.mxu0 %v1029
          %1034 = vmatprep.subr.mxu0 0.0
          %1035 = vmatpush1.msra.mxu0 0.0
          %1036 = vmatprep.subr.mxu0 0.0
          %1037 = vmatpush1.msra.mxu0 0.0
          %1038 = vmatprep.subr.mxu0 0.0
          %1039 = vmatpush1.msra.mxu0 0.0
          %1040 = vmatprep.subr.mxu0 0.0
          %1041 = vmatpush1.msra.mxu0 0.0
          %1042 = vmatprep.subr.mxu0 0.0
          %1043 = vmatpush1.msra.mxu0 0.0
          %1044 = vmatprep.subr.mxu0 0.0
          %1045 = vmatpush1.msra.mxu0 0.0
          %1046 = vmatprep.subr.mxu0 0.0
          %1047 = vmatpush1.msra.mxu0 0.0
          %1048 = vmatprep.subr.mxu0 0.0
          %1049 = vmatpush1.msra.mxu0 0.0
          %1050 = vmatprep.subr.mxu0 0.0
          %1051 = vmatpush1.msra.mxu0 0.0
          %1052 = vmatprep.subr.mxu0 0.0
          %1053 = vmatpush1.msra.mxu0 0.0
          %1054 = vmatprep.subr.mxu0 0.0
          %1055 = vmatpush1.msra.mxu0 0.0
          %1056 = vmatprep.subr.mxu0 0.0
          %1057 = vmatpush1.msra.mxu0 0.0
          %1058 = vmatprep.subr.mxu0 0.0
          %1059 = vmatpush1.msra.mxu0 0.0
          %1060 = vmatprep.subr.mxu0 0.0
          %1061 = vmatpush1.msra.mxu0 0.0
          %1062 = vmatprep.subr.mxu0 0.0
          %1063 = vmatpush1.msra.mxu0 0.0
          %1064 = vmatprep.subr.mxu0 0.0
          %1065 = vmatpush1.msra.mxu0 0.0
          %1066 = vmatprep.subr.mxu0 0.0
          %1067 = vmatpush1.msra.mxu0 0.0
          %1068 = vmatprep.subr.mxu0 0.0
          %1069 = vmatpush1.msra.mxu0 0.0
          %1070 = vmatprep.subr.mxu0 0.0
          %1071 = vmatpush1.msra.mxu0 0.0
          %1072 = vmatprep.subr.mxu0 0.0
          %1073 = vmatpush1.msra.mxu0 0.0
          %1074 = vmatprep.subr.mxu0 0.0
          %1075 = vmatpush1.msra.mxu0 0.0
          %1076 = vmatprep.subr.mxu0 0.0
          %1077 = vmatpush1.msra.mxu0 0.0
          %1078 = vmatprep.subr.mxu0 0.0
          %1079 = vmatpush1.msra.mxu0 0.0
          %1080 = vmatprep.subr.mxu0 0.0
          %1081 = vmatpush1.msra.mxu0 0.0
          %1082 = vmatprep.subr.mxu0 0.0
          %1083 = vmatpush1.msra.mxu0 0.0
          %1084 = vmatprep.subr.mxu0 0.0
          %1085 = vmatpush1.msra.mxu0 0.0
          %1086 = vmatprep.subr.mxu0 0.0
          %1087 = vmatpush1.msra.mxu0 0.0
          %1088 = vmatprep.subr.mxu0 0.0
          %1089 = vmatpush1.msra.mxu0 0.0
          %1090 = vmatprep.subr.mxu0 0.0
          %1091 = vmatpush1.msra.mxu0 0.0
          %1092 = vmatprep.subr.mxu0 0.0
          %1093 = vmatpush1.msra.mxu0 0.0
          %1094 = vmatprep.mubr.f32.mxu0 0.0
          %1095 = vmatmul.mubr.f32.gmra.mrb[0].mxu0 %v298
          %v1096 = vpop.f32.mrb[0].mxu0
          %v1097 = vadd.f32 0.0, %v1096
          %v1098 = vpop.f32.mrb[0].mxu0
          %1099 = vmatprep.mubr.f32.mxu0 0.0
          %1100 = vmatmul.mubr.f32.gmra.mrb[0].mxu0 %v301
          %v1101 = vpop.f32.mrb[0].mxu0
          %v1102 = vadd.f32 0.0, %v1101
          %v1103 = vpop.f32.mrb[0].mxu0
          %1104 = vdwg.mxu0
          %1105 = vmatprep.subr.mxu0 0.0
          %1106 = vmatpush1.msra.mxu0 %v1025
          %1107 = vmatprep.subr.mxu0 0.0
          %1108 = vmatpush1.msra.mxu0 %v1026
          %1109 = vmatprep.subr.mxu0 0.0
          %1110 = vmatpush1.msra.mxu0 0.0
          %1111 = vmatprep.subr.mxu0 0.0
          %1112 = vmatpush1.msra.mxu0 0.0
          %1113 = vmatprep.subr.mxu0 0.0
          %1114 = vmatpush1.msra.mxu0 0.0
          %1115 = vmatprep.subr.mxu0 0.0
          %1116 = vmatpush1.msra.mxu0 0.0
          %1117 = vmatprep.subr.mxu0 0.0
          %1118 = vmatpush1.msra.mxu0 0.0
          %1119 = vmatprep.subr.mxu0 0.0
          %1120 = vmatpush1.msra.mxu0 0.0
          %1121 = vmatprep.subr.mxu0 0.0
          %1122 = vmatpush1.msra.mxu0 0.0
          %1123 = vmatprep.subr.mxu0 0.0
          %1124 = vmatpush1.msra.mxu0 0.0
          %1125 = vmatprep.subr.mxu0 0.0
          %1126 = vmatpush1.msra.mxu0 0.0
          %1127 = vmatprep.subr.mxu0 0.0
          %1128 = vmatpush1.msra.mxu0 0.0
          %1129 = vmatprep.subr.mxu0 0.0
          %1130 = vmatpush1.msra.mxu0 0.0
          %1131 = vmatprep.subr.mxu0 0.0
          %1132 = vmatpush1.msra.mxu0 0.0
          %1133 = vmatprep.subr.mxu0 0.0
          %1134 = vmatpush1.msra.mxu0 0.0
          %1135 = vmatprep.subr.mxu0 0.0
          %1136 = vmatpush1.msra.mxu0 0.0
          %1137 = vmatprep.subr.mxu0 0.0
          %1138 = vmatpush1.msra.mxu0 0.0
          %1139 = vmatprep.subr.mxu0 0.0
          %1140 = vmatpush1.msra.mxu0 0.0
          %1141 = vmatprep.subr.mxu0 0.0
          %1142 = vmatpush1.msra.mxu0 0.0
          %1143 = vmatprep.subr.mxu0 0.0
          %1144 = vmatpush1.msra.mxu0 0.0
          %1145 = vmatprep.subr.mxu0 0.0
          %1146 = vmatpush1.msra.mxu0 0.0
          %1147 = vmatprep.subr.mxu0 0.0
          %1148 = vmatpush1.msra.mxu0 0.0
          %1149 = vmatprep.subr.mxu0 0.0
          %1150 = vmatpush1.msra.mxu0 0.0
          %1151 = vmatprep.subr.mxu0 0.0
          %1152 = vmatpush1.msra.mxu0 0.0
          %1153 = vmatprep.subr.mxu0 0.0
          %1154 = vmatpush1.msra.mxu0 0.0
          %1155 = vmatprep.subr.mxu0 0.0
          %1156 = vmatpush1.msra.mxu0 0.0
          %1157 = vmatprep.subr.mxu0 0.0
          %1158 = vmatpush1.msra.mxu0 0.0
          %1159 = vmatprep.subr.mxu0 0.0
          %1160 = vmatpush1.msra.mxu0 0.0
          %1161 = vmatprep.subr.mxu0 0.0
          %1162 = vmatpush1.msra.mxu0 0.0
          %1163 = vmatprep.subr.mxu0 0.0
          %1164 = vmatpush1.msra.mxu0 0.0
          %1165 = vmatprep.subr.mxu0 0.0
          %1166 = vmatpush1.msra.mxu0 0.0
          %1167 = vmatprep.subr.mxu0 0.0
          %1168 = vmatpush1.msra.mxu0 0.0
          %1169 = vmatprep.mubr.f32.mxu0 0.0
          %1170 = vmatmul.mubr.f32.gmra.mrb[0].mxu0 %v379
          %v1171 = vpop.f32.mrb[0].mxu0
          %v1172 = vadd.f32 %v1097, %v1171
          %v1173 = vpop.f32.mrb[0].mxu0
          %1174 = vmatprep.mubr.f32.mxu0 0.0
          %1175 = vmatmul.mubr.f32.gmra.mrb[0].mxu0 %v382
          %v1176 = vpop.f32.mrb[0].mxu0
          %v1177 = vadd.f32 %v1102, %v1176
          %v1178 = vpop.f32.mrb[0].mxu0
          %1179 = vdwg.mxu0
          %s1180 = scalar_lea.vmem [#allocation7], 48
          %v1181 = vld [vmem:[%s1180] sm:$0xff]
          %v1182 = vld [vmem:[%s1180 + $0x8] sm:$0xff]
          %v1184 = vsel %vm274, %v1181, 0
          %v1187 = vsel %vm274, %v1182, 0
          %1189 = vmatprep.subr.mxu0 0.0
          %1190 = vmatpush1.msra.mxu0 %v1172
          %1191 = vmatprep.subr.mxu0 0.0
          %1192 = vmatpush1.msra.mxu0 %v1177
          %1193 = vmatprep.subr.mxu0 0.0
          %1194 = vmatpush1.msra.mxu0 0.0
          %1195 = vmatprep.subr.mxu0 0.0
          %1196 = vmatpush1.msra.mxu0 0.0
          %1197 = vmatprep.subr.mxu0 0.0
          %1198 = vmatpush1.msra.mxu0 0.0
          %1199 = vmatprep.subr.mxu0 0.0
          %1200 = vmatpush1.msra.mxu0 0.0
          %1201 = vmatprep.subr.mxu0 0.0
          %1202 = vmatpush1.msra.mxu0 0.0
          %1203 = vmatprep.subr.mxu0 0.0
          %1204 = vmatpush1.msra.mxu0 0.0
          %1205 = vmatprep.subr.mxu0 0.0
          %1206 = vmatpush1.msra.mxu0 0.0
          %1207 = vmatprep.subr.mxu0 0.0
          %1208 = vmatpush1.msra.mxu0 0.0
          %1209 = vmatprep.subr.mxu0 0.0
          %1210 = vmatpush1.msra.mxu0 0.0
          %1211 = vmatprep.subr.mxu0 0.0
          %1212 = vmatpush1.msra.mxu0 0.0
          %1213 = vmatprep.subr.mxu0 0.0
          %1214 = vmatpush1.msra.mxu0 0.0
          %1215 = vmatprep.subr.mxu0 0.0
          %1216 = vmatpush1.msra.mxu0 0.0
          %1217 = vmatprep.subr.mxu0 0.0
          %1218 = vmatpush1.msra.mxu0 0.0
          %1219 = vmatprep.subr.mxu0 0.0
          %1220 = vmatpush1.msra.mxu0 0.0
          %1221 = vmatprep.subr.mxu0 0.0
          %1222 = vmatpush1.msra.mxu0 0.0
          %1223 = vmatprep.subr.mxu0 0.0
          %1224 = vmatpush1.msra.mxu0 0.0
          %1225 = vmatprep.subr.mxu0 0.0
          %1226 = vmatpush1.msra.mxu0 0.0
          %1227 = vmatprep.subr.mxu0 0.0
          %1228 = vmatpush1.msra.mxu0 0.0
          %1229 = vmatprep.subr.mxu0 0.0
          %1230 = vmatpush1.msra.mxu0 0.0
          %1231 = vmatprep.subr.mxu0 0.0
          %1232 = vmatpush1.msra.mxu0 0.0
          %1233 = vmatprep.subr.mxu0 0.0
          %1234 = vmatpush1.msra.mxu0 0.0
          %1235 = vmatprep.subr.mxu0 0.0
          %1236 = vmatpush1.msra.mxu0 0.0
          %1237 = vmatprep.subr.mxu0 0.0
          %1238 = vmatpush1.msra.mxu0 0.0
          %1239 = vmatprep.subr.mxu0 0.0
          %1240 = vmatpush1.msra.mxu0 0.0
          %1241 = vmatprep.subr.mxu0 0.0
          %1242 = vmatpush1.msra.mxu0 0.0
          %1243 = vmatprep.subr.mxu0 0.0
          %1244 = vmatpush1.msra.mxu0 0.0
          %1245 = vmatprep.subr.mxu0 0.0
          %1246 = vmatpush1.msra.mxu0 0.0
          %1247 = vmatprep.subr.mxu0 0.0
          %1248 = vmatpush1.msra.mxu0 0.0
          %1249 = vmatprep.subr.mxu0 0.0
          %1250 = vmatpush1.msra.mxu0 0.0
          %1251 = vmatprep.subr.mxu0 0.0
          %1252 = vmatpush1.msra.mxu0 0.0
          %1253 = vmatprep.mubr.f32.mxu0 0.0
          %1254 = vmatmul.mubr.f32.gmra.mrb[0].mxu0 %v1184
          %v1255 = vpop.f32.mrb[0].mxu0
          %v1256 = vadd.f32 0.0, %v1255
          %v1257 = vpop.f32.mrb[0].mxu0
          %1258 = vmatprep.mubr.f32.mxu0 0.0
          %1259 = vmatmul.mubr.f32.gmra.mrb[0].mxu0 %v1187
          %v1260 = vpop.f32.mrb[0].mxu0
          %v1261 = vadd.f32 0.0, %v1260
          %v1262 = vpop.f32.mrb[0].mxu0
          %1263 = vdwg.mxu0
          %v1264 = vadd.f32 %v1022, %v1256
          %v1265 = vadd.f32 %v1023, %v1261
          %s1266 = scalar_lea.vmem [#allocation9], 64
          %v1267 = vld [vmem:[%s1266] sm:$0xff]
          %v1268 = vld [vmem:[%s1266 + $0x8] sm:$0xff]
          %s1269 = scalar_lea.vmem [#allocation9], 176
          %v1270 = vld [vmem:[%s1269] sm:$0xff]
          %v1271 = vld [vmem:[%s1269 + $0x8] sm:$0xff]
          %1272 = vmatprep.subr.mxu0 0.0
          %1273 = vmatpush1.msra.mxu0 %v1270
          %1274 = vmatprep.subr.mxu0 0.0
          %1275 = vmatpush1.msra.mxu0 %v1271
          %1276 = vmatprep.subr.mxu0 0.0
          %1277 = vmatpush1.msra.mxu0 0.0
          %1278 = vmatprep.subr.mxu0 0.0
          %1279 = vmatpush1.msra.mxu0 0.0
          %1280 = vmatprep.subr.mxu0 0.0
          %1281 = vmatpush1.msra.mxu0 0.0
          %1282 = vmatprep.subr.mxu0 0.0
          %1283 = vmatpush1.msra.mxu0 0.0
          %1284 = vmatprep.subr.mxu0 0.0
          %1285 = vmatpush1.msra.mxu0 0.0
          %1286 = vmatprep.subr.mxu0 0.0
          %1287 = vmatpush1.msra.mxu0 0.0
          %1288 = vmatprep.subr.mxu0 0.0
          %1289 = vmatpush1.msra.mxu0 0.0
          %1290 = vmatprep.subr.mxu0 0.0
          %1291 = vmatpush1.msra.mxu0 0.0
          %1292 = vmatprep.subr.mxu0 0.0
          %1293 = vmatpush1.msra.mxu0 0.0
          %1294 = vmatprep.subr.mxu0 0.0
          %1295 = vmatpush1.msra.mxu0 0.0
          %1296 = vmatprep.subr.mxu0 0.0
          %1297 = vmatpush1.msra.mxu0 0.0
          %1298 = vmatprep.subr.mxu0 0.0
          %1299 = vmatpush1.msra.mxu0 0.0
          %1300 = vmatprep.subr.mxu0 0.0
          %1301 = vmatpush1.msra.mxu0 0.0
          %1302 = vmatprep.subr.mxu0 0.0
          %1303 = vmatpush1.msra.mxu0 0.0
          %1304 = vmatprep.subr.mxu0 0.0
          %1305 = vmatpush1.msra.mxu0 0.0
          %1306 = vmatprep.subr.mxu0 0.0
          %1307 = vmatpush1.msra.mxu0 0.0
          %1308 = vmatprep.subr.mxu0 0.0
          %1309 = vmatpush1.msra.mxu0 0.0
          %1310 = vmatprep.subr.mxu0 0.0
          %1311 = vmatpush1.msra.mxu0 0.0
          %1312 = vmatprep.subr.mxu0 0.0
          %1313 = vmatpush1.msra.mxu0 0.0
          %1314 = vmatprep.subr.mxu0 0.0
          %1315 = vmatpush1.msra.mxu0 0.0
          %1316 = vmatprep.subr.mxu0 0.0
          %1317 = vmatpush1.msra.mxu0 0.0
          %1318 = vmatprep.subr.mxu0 0.0
          %1319 = vmatpush1.msra.mxu0 0.0
          %1320 = vmatprep.subr.mxu0 0.0
          %1321 = vmatpush1.msra.mxu0 0.0
          %1322 = vmatprep.subr.mxu0 0.0
          %1323 = vmatpush1.msra.mxu0 0.0
          %1324 = vmatprep.subr.mxu0 0.0
          %1325 = vmatpush1.msra.mxu0 0.0
          %1326 = vmatprep.subr.mxu0 0.0
          %1327 = vmatpush1.msra.mxu0 0.0
          %1328 = vmatprep.subr.mxu0 0.0
          %1329 = vmatpush1.msra.mxu0 0.0
          %1330 = vmatprep.subr.mxu0 0.0
          %1331 = vmatpush1.msra.mxu0 0.0
          %1332 = vmatprep.subr.mxu0 0.0
          %1333 = vmatpush1.msra.mxu0 0.0
          %1334 = vmatprep.subr.mxu0 0.0
          %1335 = vmatpush1.msra.mxu0 0.0
          %1336 = vmatprep.mubr.f32.mxu0 0.0
          %1337 = vmatmul.mubr.f32.gmra.mrb[0].mxu0 %v298
          %v1338 = vpop.f32.mrb[0].mxu0
          %v1339 = vadd.f32 0.0, %v1338
          %v1340 = vpop.f32.mrb[0].mxu0
          %1341 = vmatprep.mubr.f32.mxu0 0.0
          %1342 = vmatmul.mubr.f32.gmra.mrb[0].mxu0 %v301
          %v1343 = vpop.f32.mrb[0].mxu0
          %v1344 = vadd.f32 0.0, %v1343
          %v1345 = vpop.f32.mrb[0].mxu0
          %1346 = vdwg.mxu0
          %1347 = vmatprep.subr.mxu0 0.0
          %1348 = vmatpush1.msra.mxu0 %v1267
          %1349 = vmatprep.subr.mxu0 0.0
          %1350 = vmatpush1.msra.mxu0 %v1268
          %1351 = vmatprep.subr.mxu0 0.0
          %1352 = vmatpush1.msra.mxu0 0.0
          %1353 = vmatprep.subr.mxu0 0.0
          %1354 = vmatpush1.msra.mxu0 0.0
          %1355 = vmatprep.subr.mxu0 0.0
          %1356 = vmatpush1.msra.mxu0 0.0
          %1357 = vmatprep.subr.mxu0 0.0
          %1358 = vmatpush1.msra.mxu0 0.0
          %1359 = vmatprep.subr.mxu0 0.0
          %1360 = vmatpush1.msra.mxu0 0.0
          %1361 = vmatprep.subr.mxu0 0.0
          %1362 = vmatpush1.msra.mxu0 0.0
          %1363 = vmatprep.subr.mxu0 0.0
          %1364 = vmatpush1.msra.mxu0 0.0
          %1365 = vmatprep.subr.mxu0 0.0
          %1366 = vmatpush1.msra.mxu0 0.0
          %1367 = vmatprep.subr.mxu0 0.0
          %1368 = vmatpush1.msra.mxu0 0.0
          %1369 = vmatprep.subr.mxu0 0.0
          %1370 = vmatpush1.msra.mxu0 0.0
          %1371 = vmatprep.subr.mxu0 0.0
          %1372 = vmatpush1.msra.mxu0 0.0
          %1373 = vmatprep.subr.mxu0 0.0
          %1374 = vmatpush1.msra.mxu0 0.0
          %1375 = vmatprep.subr.mxu0 0.0
          %1376 = vmatpush1.msra.mxu0 0.0
          %1377 = vmatprep.subr.mxu0 0.0
          %1378 = vmatpush1.msra.mxu0 0.0
          %1379 = vmatprep.subr.mxu0 0.0
          %1380 = vmatpush1.msra.mxu0 0.0
          %1381 = vmatprep.subr.mxu0 0.0
          %1382 = vmatpush1.msra.mxu0 0.0
          %1383 = vmatprep.subr.mxu0 0.0
          %1384 = vmatpush1.msra.mxu0 0.0
          %1385 = vmatprep.subr.mxu0 0.0
          %1386 = vmatpush1.msra.mxu0 0.0
          %1387 = vmatprep.subr.mxu0 0.0
          %1388 = vmatpush1.msra.mxu0 0.0
          %1389 = vmatprep.subr.mxu0 0.0
          %1390 = vmatpush1.msra.mxu0 0.0
          %1391 = vmatprep.subr.mxu0 0.0
          %1392 = vmatpush1.msra.mxu0 0.0
          %1393 = vmatprep.subr.mxu0 0.0
          %1394 = vmatpush1.msra.mxu0 0.0
          %1395 = vmatprep.subr.mxu0 0.0
          %1396 = vmatpush1.msra.mxu0 0.0
          %1397 = vmatprep.subr.mxu0 0.0
          %1398 = vmatpush1.msra.mxu0 0.0
          %1399 = vmatprep.subr.mxu0 0.0
          %1400 = vmatpush1.msra.mxu0 0.0
          %1401 = vmatprep.subr.mxu0 0.0
          %1402 = vmatpush1.msra.mxu0 0.0
          %1403 = vmatprep.subr.mxu0 0.0
          %1404 = vmatpush1.msra.mxu0 0.0
          %1405 = vmatprep.subr.mxu0 0.0
          %1406 = vmatpush1.msra.mxu0 0.0
          %1407 = vmatprep.subr.mxu0 0.0
          %1408 = vmatpush1.msra.mxu0 0.0
          %1409 = vmatprep.subr.mxu0 0.0
          %1410 = vmatpush1.msra.mxu0 0.0
          %1411 = vmatprep.mubr.f32.mxu0 0.0
          %1412 = vmatmul.mubr.f32.gmra.mrb[0].mxu0 %v379
          %v1413 = vpop.f32.mrb[0].mxu0
          %v1414 = vadd.f32 %v1339, %v1413
          %v1415 = vpop.f32.mrb[0].mxu0
          %1416 = vmatprep.mubr.f32.mxu0 0.0
          %1417 = vmatmul.mubr.f32.gmra.mrb[0].mxu0 %v382
          %v1418 = vpop.f32.mrb[0].mxu0
          %v1419 = vadd.f32 %v1344, %v1418
          %v1420 = vpop.f32.mrb[0].mxu0
          %1421 = vdwg.mxu0
          %s1422 = scalar_lea.vmem [#allocation7], 64
          %v1423 = vld [vmem:[%s1422] sm:$0xff]
          %v1424 = vld [vmem:[%s1422 + $0x8] sm:$0xff]
          %v1426 = vsel %vm274, %v1423, 0
          %v1429 = vsel %vm274, %v1424, 0
          %1431 = vmatprep.subr.mxu0 0.0
          %1432 = vmatpush1.msra.mxu0 %v1414
          %1433 = vmatprep.subr.mxu0 0.0
          %1434 = vmatpush1.msra.mxu0 %v1419
          %1435 = vmatprep.subr.mxu0 0.0
          %1436 = vmatpush1.msra.mxu0 0.0
          %1437 = vmatprep.subr.mxu0 0.0
          %1438 = vmatpush1.msra.mxu0 0.0
          %1439 = vmatprep.subr.mxu0 0.0
          %1440 = vmatpush1.msra.mxu0 0.0
          %1441 = vmatprep.subr.mxu0 0.0
          %1442 = vmatpush1.msra.mxu0 0.0
          %1443 = vmatprep.subr.mxu0 0.0
          %1444 = vmatpush1.msra.mxu0 0.0
          %1445 = vmatprep.subr.mxu0 0.0
          %1446 = vmatpush1.msra.mxu0 0.0
          %1447 = vmatprep.subr.mxu0 0.0
          %1448 = vmatpush1.msra.mxu0 0.0
          %1449 = vmatprep.subr.mxu0 0.0
          %1450 = vmatpush1.msra.mxu0 0.0
          %1451 = vmatprep.subr.mxu0 0.0
          %1452 = vmatpush1.msra.mxu0 0.0
          %1453 = vmatprep.subr.mxu0 0.0
          %1454 = vmatpush1.msra.mxu0 0.0
          %1455 = vmatprep.subr.mxu0 0.0
          %1456 = vmatpush1.msra.mxu0 0.0
          %1457 = vmatprep.subr.mxu0 0.0
          %1458 = vmatpush1.msra.mxu0 0.0
          %1459 = vmatprep.subr.mxu0 0.0
          %1460 = vmatpush1.msra.mxu0 0.0
          %1461 = vmatprep.subr.mxu0 0.0
          %1462 = vmatpush1.msra.mxu0 0.0
          %1463 = vmatprep.subr.mxu0 0.0
          %1464 = vmatpush1.msra.mxu0 0.0
          %1465 = vmatprep.subr.mxu0 0.0
          %1466 = vmatpush1.msra.mxu0 0.0
          %1467 = vmatprep.subr.mxu0 0.0
          %1468 = vmatpush1.msra.mxu0 0.0
          %1469 = vmatprep.subr.mxu0 0.0
          %1470 = vmatpush1.msra.mxu0 0.0
          %1471 = vmatprep.subr.mxu0 0.0
          %1472 = vmatpush1.msra.mxu0 0.0
          %1473 = vmatprep.subr.mxu0 0.0
          %1474 = vmatpush1.msra.mxu0 0.0
          %1475 = vmatprep.subr.mxu0 0.0
          %1476 = vmatpush1.msra.mxu0 0.0
          %1477 = vmatprep.subr.mxu0 0.0
          %1478 = vmatpush1.msra.mxu0 0.0
          %1479 = vmatprep.subr.mxu0 0.0
          %1480 = vmatpush1.msra.mxu0 0.0
          %1481 = vmatprep.subr.mxu0 0.0
          %1482 = vmatpush1.msra.mxu0 0.0
          %1483 = vmatprep.subr.mxu0 0.0
          %1484 = vmatpush1.msra.mxu0 0.0
          %1485 = vmatprep.subr.mxu0 0.0
          %1486 = vmatpush1.msra.mxu0 0.0
          %1487 = vmatprep.subr.mxu0 0.0
          %1488 = vmatpush1.msra.mxu0 0.0
          %1489 = vmatprep.subr.mxu0 0.0
          %1490 = vmatpush1.msra.mxu0 0.0
          %1491 = vmatprep.subr.mxu0 0.0
          %1492 = vmatpush1.msra.mxu0 0.0
          %1493 = vmatprep.subr.mxu0 0.0
          %1494 = vmatpush1.msra.mxu0 0.0
          %1495 = vmatprep.mubr.f32.mxu0 0.0
          %1496 = vmatmul.mubr.f32.gmra.mrb[0].mxu0 %v1426
          %v1497 = vpop.f32.mrb[0].mxu0
          %v1498 = vadd.f32 0.0, %v1497
          %v1499 = vpop.f32.mrb[0].mxu0
          %1500 = vmatprep.mubr.f32.mxu0 0.0
          %1501 = vmatmul.mubr.f32.gmra.mrb[0].mxu0 %v1429
          %v1502 = vpop.f32.mrb[0].mxu0
          %v1503 = vadd.f32 0.0, %v1502
          %v1504 = vpop.f32.mrb[0].mxu0
          %1505 = vdwg.mxu0
          %v1506 = vadd.f32 %v1264, %v1498
          %v1507 = vadd.f32 %v1265, %v1503
          %s1508 = scalar_lea.vmem [#allocation9], 80
          %v1509 = vld [vmem:[%s1508] sm:$0xff]
          %v1510 = vld [vmem:[%s1508 + $0x8] sm:$0xff]
          %s1511 = scalar_lea.vmem [#allocation9], 192
          %v1512 = vld [vmem:[%s1511] sm:$0xff]
          %v1513 = vld [vmem:[%s1511 + $0x8] sm:$0xff]
          %1514 = vmatprep.subr.mxu0 0.0
          %1515 = vmatpush1.msra.mxu0 %v1512
          %1516 = vmatprep.subr.mxu0 0.0
          %1517 = vmatpush1.msra.mxu0 %v1513
          %1518 = vmatprep.subr.mxu0 0.0
          %1519 = vmatpush1.msra.mxu0 0.0
          %1520 = vmatprep.subr.mxu0 0.0
          %1521 = vmatpush1.msra.mxu0 0.0
          %1522 = vmatprep.subr.mxu0 0.0
          %1523 = vmatpush1.msra.mxu0 0.0
          %1524 = vmatprep.subr.mxu0 0.0
          %1525 = vmatpush1.msra.mxu0 0.0
          %1526 = vmatprep.subr.mxu0 0.0
          %1527 = vmatpush1.msra.mxu0 0.0
          %1528 = vmatprep.subr.mxu0 0.0
          %1529 = vmatpush1.msra.mxu0 0.0
          %1530 = vmatprep.subr.mxu0 0.0
          %1531 = vmatpush1.msra.mxu0 0.0
          %1532 = vmatprep.subr.mxu0 0.0
          %1533 = vmatpush1.msra.mxu0 0.0
          %1534 = vmatprep.subr.mxu0 0.0
          %1535 = vmatpush1.msra.mxu0 0.0
          %1536 = vmatprep.subr.mxu0 0.0
          %1537 = vmatpush1.msra.mxu0 0.0
          %1538 = vmatprep.subr.mxu0 0.0
          %1539 = vmatpush1.msra.mxu0 0.0
          %1540 = vmatprep.subr.mxu0 0.0
          %1541 = vmatpush1.msra.mxu0 0.0
          %1542 = vmatprep.subr.mxu0 0.0
          %1543 = vmatpush1.msra.mxu0 0.0
          %1544 = vmatprep.subr.mxu0 0.0
          %1545 = vmatpush1.msra.mxu0 0.0
          %1546 = vmatprep.subr.mxu0 0.0
          %1547 = vmatpush1.msra.mxu0 0.0
          %1548 = vmatprep.subr.mxu0 0.0
          %1549 = vmatpush1.msra.mxu0 0.0
          %1550 = vmatprep.subr.mxu0 0.0
          %1551 = vmatpush1.msra.mxu0 0.0
          %1552 = vmatprep.subr.mxu0 0.0
          %1553 = vmatpush1.msra.mxu0 0.0
          %1554 = vmatprep.subr.mxu0 0.0
          %1555 = vmatpush1.msra.mxu0 0.0
          %1556 = vmatprep.subr.mxu0 0.0
          %1557 = vmatpush1.msra.mxu0 0.0
          %1558 = vmatprep.subr.mxu0 0.0
          %1559 = vmatpush1.msra.mxu0 0.0
          %1560 = vmatprep.subr.mxu0 0.0
          %1561 = vmatpush1.msra.mxu0 0.0
          %1562 = vmatprep.subr.mxu0 0.0
          %1563 = vmatpush1.msra.mxu0 0.0
          %1564 = vmatprep.subr.mxu0 0.0
          %1565 = vmatpush1.msra.mxu0 0.0
          %1566 = vmatprep.subr.mxu0 0.0
          %1567 = vmatpush1.msra.mxu0 0.0
          %1568 = vmatprep.subr.mxu0 0.0
          %1569 = vmatpush1.msra.mxu0 0.0
          %1570 = vmatprep.subr.mxu0 0.0
          %1571 = vmatpush1.msra.mxu0 0.0
          %1572 = vmatprep.subr.mxu0 0.0
          %1573 = vmatpush1.msra.mxu0 0.0
          %1574 = vmatprep.subr.mxu0 0.0
          %1575 = vmatpush1.msra.mxu0 0.0
          %1576 = vmatprep.subr.mxu0 0.0
          %1577 = vmatpush1.msra.mxu0 0.0
          %1578 = vmatprep.mubr.f32.mxu0 0.0
          %1579 = vmatmul.mubr.f32.gmra.mrb[0].mxu0 %v298
          %v1580 = vpop.f32.mrb[0].mxu0
          %v1581 = vadd.f32 0.0, %v1580
          %v1582 = vpop.f32.mrb[0].mxu0
          %1583 = vmatprep.mubr.f32.mxu0 0.0
          %1584 = vmatmul.mubr.f32.gmra.mrb[0].mxu0 %v301
          %v1585 = vpop.f32.mrb[0].mxu0
          %v1586 = vadd.f32 0.0, %v1585
          %v1587 = vpop.f32.mrb[0].mxu0
          %1588 = vdwg.mxu0
          %1589 = vmatprep.subr.mxu0 0.0
          %1590 = vmatpush1.msra.mxu0 %v1509
          %1591 = vmatprep.subr.mxu0 0.0
          %1592 = vmatpush1.msra.mxu0 %v1510
          %1593 = vmatprep.subr.mxu0 0.0
          %1594 = vmatpush1.msra.mxu0 0.0
          %1595 = vmatprep.subr.mxu0 0.0
          %1596 = vmatpush1.msra.mxu0 0.0
          %1597 = vmatprep.subr.mxu0 0.0
          %1598 = vmatpush1.msra.mxu0 0.0
          %1599 = vmatprep.subr.mxu0 0.0
          %1600 = vmatpush1.msra.mxu0 0.0
          %1601 = vmatprep.subr.mxu0 0.0
          %1602 = vmatpush1.msra.mxu0 0.0
          %1603 = vmatprep.subr.mxu0 0.0
          %1604 = vmatpush1.msra.mxu0 0.0
          %1605 = vmatprep.subr.mxu0 0.0
          %1606 = vmatpush1.msra.mxu0 0.0
          %1607 = vmatprep.subr.mxu0 0.0
          %1608 = vmatpush1.msra.mxu0 0.0
          %1609 = vmatprep.subr.mxu0 0.0
          %1610 = vmatpush1.msra.mxu0 0.0
          %1611 = vmatprep.subr.mxu0 0.0
          %1612 = vmatpush1.msra.mxu0 0.0
          %1613 = vmatprep.subr.mxu0 0.0
          %1614 = vmatpush1.msra.mxu0 0.0
          %1615 = vmatprep.subr.mxu0 0.0
          %1616 = vmatpush1.msra.mxu0 0.0
          %1617 = vmatprep.subr.mxu0 0.0
          %1618 = vmatpush1.msra.mxu0 0.0
          %1619 = vmatprep.subr.mxu0 0.0
          %1620 = vmatpush1.msra.mxu0 0.0
          %1621 = vmatprep.subr.mxu0 0.0
          %1622 = vmatpush1.msra.mxu0 0.0
          %1623 = vmatprep.subr.mxu0 0.0
          %1624 = vmatpush1.msra.mxu0 0.0
          %1625 = vmatprep.subr.mxu0 0.0
          %1626 = vmatpush1.msra.mxu0 0.0
          %1627 = vmatprep.subr.mxu0 0.0
          %1628 = vmatpush1.msra.mxu0 0.0
          %1629 = vmatprep.subr.mxu0 0.0
          %1630 = vmatpush1.msra.mxu0 0.0
          %1631 = vmatprep.subr.mxu0 0.0
          %1632 = vmatpush1.msra.mxu0 0.0
          %1633 = vmatprep.subr.mxu0 0.0
          %1634 = vmatpush1.msra.mxu0 0.0
          %1635 = vmatprep.subr.mxu0 0.0
          %1636 = vmatpush1.msra.mxu0 0.0
          %1637 = vmatprep.subr.mxu0 0.0
          %1638 = vmatpush1.msra.mxu0 0.0
          %1639 = vmatprep.subr.mxu0 0.0
          %1640 = vmatpush1.msra.mxu0 0.0
          %1641 = vmatprep.subr.mxu0 0.0
          %1642 = vmatpush1.msra.mxu0 0.0
          %1643 = vmatprep.subr.mxu0 0.0
          %1644 = vmatpush1.msra.mxu0 0.0
          %1645 = vmatprep.subr.mxu0 0.0
          %1646 = vmatpush1.msra.mxu0 0.0
          %1647 = vmatprep.subr.mxu0 0.0
          %1648 = vmatpush1.msra.mxu0 0.0
          %1649 = vmatprep.subr.mxu0 0.0
          %1650 = vmatpush1.msra.mxu0 0.0
          %1651 = vmatprep.subr.mxu0 0.0
          %1652 = vmatpush1.msra.mxu0 0.0
          %1653 = vmatprep.mubr.f32.mxu0 0.0
          %1654 = vmatmul.mubr.f32.gmra.mrb[0].mxu0 %v379
          %v1655 = vpop.f32.mrb[0].mxu0
          %v1656 = vadd.f32 %v1581, %v1655
          %v1657 = vpop.f32.mrb[0].mxu0
          %1658 = vmatprep.mubr.f32.mxu0 0.0
          %1659 = vmatmul.mubr.f32.gmra.mrb[0].mxu0 %v382
          %v1660 = vpop.f32.mrb[0].mxu0
          %v1661 = vadd.f32 %v1586, %v1660
          %v1662 = vpop.f32.mrb[0].mxu0
          %1663 = vdwg.mxu0
          %s1664 = scalar_lea.vmem [#allocation7], 80
          %v1665 = vld [vmem:[%s1664] sm:$0xff]
          %v1666 = vld [vmem:[%s1664 + $0x8] sm:$0xff]
          %v1668 = vsel %vm274, %v1665, 0
          %v1671 = vsel %vm274, %v1666, 0
          %1673 = vmatprep.subr.mxu0 0.0
          %1674 = vmatpush1.msra.mxu0 %v1656
          %1675 = vmatprep.subr.mxu0 0.0
          %1676 = vmatpush1.msra.mxu0 %v1661
          %1677 = vmatprep.subr.mxu0 0.0
          %1678 = vmatpush1.msra.mxu0 0.0
          %1679 = vmatprep.subr.mxu0 0.0
          %1680 = vmatpush1.msra.mxu0 0.0
          %1681 = vmatprep.subr.mxu0 0.0
          %1682 = vmatpush1.msra.mxu0 0.0
          %1683 = vmatprep.subr.mxu0 0.0
          %1684 = vmatpush1.msra.mxu0 0.0
          %1685 = vmatprep.subr.mxu0 0.0
          %1686 = vmatpush1.msra.mxu0 0.0
          %1687 = vmatprep.subr.mxu0 0.0
          %1688 = vmatpush1.msra.mxu0 0.0
          %1689 = vmatprep.subr.mxu0 0.0
          %1690 = vmatpush1.msra.mxu0 0.0
          %1691 = vmatprep.subr.mxu0 0.0
          %1692 = vmatpush1.msra.mxu0 0.0
          %1693 = vmatprep.subr.mxu0 0.0
          %1694 = vmatpush1.msra.mxu0 0.0
          %1695 = vmatprep.subr.mxu0 0.0
          %1696 = vmatpush1.msra.mxu0 0.0
          %1697 = vmatprep.subr.mxu0 0.0
          %1698 = vmatpush1.msra.mxu0 0.0
          %1699 = vmatprep.subr.mxu0 0.0
          %1700 = vmatpush1.msra.mxu0 0.0
          %1701 = vmatprep.subr.mxu0 0.0
          %1702 = vmatpush1.msra.mxu0 0.0
          %1703 = vmatprep.subr.mxu0 0.0
          %1704 = vmatpush1.msra.mxu0 0.0
          %1705 = vmatprep.subr.mxu0 0.0
          %1706 = vmatpush1.msra.mxu0 0.0
          %1707 = vmatprep.subr.mxu0 0.0
          %1708 = vmatpush1.msra.mxu0 0.0
          %1709 = vmatprep.subr.mxu0 0.0
          %1710 = vmatpush1.msra.mxu0 0.0
          %1711 = vmatprep.subr.mxu0 0.0
          %1712 = vmatpush1.msra.mxu0 0.0
          %1713 = vmatprep.subr.mxu0 0.0
          %1714 = vmatpush1.msra.mxu0 0.0
          %1715 = vmatprep.subr.mxu0 0.0
          %1716 = vmatpush1.msra.mxu0 0.0
          %1717 = vmatprep.subr.mxu0 0.0
          %1718 = vmatpush1.msra.mxu0 0.0
          %1719 = vmatprep.subr.mxu0 0.0
          %1720 = vmatpush1.msra.mxu0 0.0
          %1721 = vmatprep.subr.mxu0 0.0
          %1722 = vmatpush1.msra.mxu0 0.0
          %1723 = vmatprep.subr.mxu0 0.0
          %1724 = vmatpush1.msra.mxu0 0.0
          %1725 = vmatprep.subr.mxu0 0.0
          %1726 = vmatpush1.msra.mxu0 0.0
          %1727 = vmatprep.subr.mxu0 0.0
          %1728 = vmatpush1.msra.mxu0 0.0
          %1729 = vmatprep.subr.mxu0 0.0
          %1730 = vmatpush1.msra.mxu0 0.0
          %1731 = vmatprep.subr.mxu0 0.0
          %1732 = vmatpush1.msra.mxu0 0.0
          %1733 = vmatprep.subr.mxu0 0.0
          %1734 = vmatpush1.msra.mxu0 0.0
          %1735 = vmatprep.subr.mxu0 0.0
          %1736 = vmatpush1.msra.mxu0 0.0
          %1737 = vmatprep.mubr.f32.mxu0 0.0
          %1738 = vmatmul.mubr.f32.gmra.mrb[0].mxu0 %v1668
          %v1739 = vpop.f32.mrb[0].mxu0
          %v1740 = vadd.f32 0.0, %v1739
          %v1741 = vpop.f32.mrb[0].mxu0
          %1742 = vmatprep.mubr.f32.mxu0 0.0
          %1743 = vmatmul.mubr.f32.gmra.mrb[0].mxu0 %v1671
          %v1744 = vpop.f32.mrb[0].mxu0
          %v1745 = vadd.f32 0.0, %v1744
          %v1746 = vpop.f32.mrb[0].mxu0
          %1747 = vdwg.mxu0
          %v1748 = vadd.f32 %v1506, %v1740
          %v1749 = vadd.f32 %v1507, %v1745
          %s1750 = scalar_lea.vmem [#allocation9], 96
          %v1751 = vld [vmem:[%s1750] sm:$0xff]
          %v1752 = vld [vmem:[%s1750 + $0x8] sm:$0xff]
          %s1753 = scalar_lea.vmem [#allocation9], 208
          %v1754 = vld [vmem:[%s1753] sm:$0xff]
          %v1755 = vld [vmem:[%s1753 + $0x8] sm:$0xff]
          %1756 = vmatprep.subr.mxu0 0.0
          %1757 = vmatpush1.msra.mxu0 %v1754
          %1758 = vmatprep.subr.mxu0 0.0
          %1759 = vmatpush1.msra.mxu0 %v1755
          %1760 = vmatprep.subr.mxu0 0.0
          %1761 = vmatpush1.msra.mxu0 0.0
          %1762 = vmatprep.subr.mxu0 0.0
          %1763 = vmatpush1.msra.mxu0 0.0
          %1764 = vmatprep.subr.mxu0 0.0
          %1765 = vmatpush1.msra.mxu0 0.0
          %1766 = vmatprep.subr.mxu0 0.0
          %1767 = vmatpush1.msra.mxu0 0.0
          %1768 = vmatprep.subr.mxu0 0.0
          %1769 = vmatpush1.msra.mxu0 0.0
          %1770 = vmatprep.subr.mxu0 0.0
          %1771 = vmatpush1.msra.mxu0 0.0
          %1772 = vmatprep.subr.mxu0 0.0
          %1773 = vmatpush1.msra.mxu0 0.0
          %1774 = vmatprep.subr.mxu0 0.0
          %1775 = vmatpush1.msra.mxu0 0.0
          %1776 = vmatprep.subr.mxu0 0.0
          %1777 = vmatpush1.msra.mxu0 0.0
          %1778 = vmatprep.subr.mxu0 0.0
          %1779 = vmatpush1.msra.mxu0 0.0
          %1780 = vmatprep.subr.mxu0 0.0
          %1781 = vmatpush1.msra.mxu0 0.0
          %1782 = vmatprep.subr.mxu0 0.0
          %1783 = vmatpush1.msra.mxu0 0.0
          %1784 = vmatprep.subr.mxu0 0.0
          %1785 = vmatpush1.msra.mxu0 0.0
          %1786 = vmatprep.subr.mxu0 0.0
          %1787 = vmatpush1.msra.mxu0 0.0
          %1788 = vmatprep.subr.mxu0 0.0
          %1789 = vmatpush1.msra.mxu0 0.0
          %1790 = vmatprep.subr.mxu0 0.0
          %1791 = vmatpush1.msra.mxu0 0.0
          %1792 = vmatprep.subr.mxu0 0.0
          %1793 = vmatpush1.msra.mxu0 0.0
          %1794 = vmatprep.subr.mxu0 0.0
          %1795 = vmatpush1.msra.mxu0 0.0
          %1796 = vmatprep.subr.mxu0 0.0
          %1797 = vmatpush1.msra.mxu0 0.0
          %1798 = vmatprep.subr.mxu0 0.0
          %1799 = vmatpush1.msra.mxu0 0.0
          %1800 = vmatprep.subr.mxu0 0.0
          %1801 = vmatpush1.msra.mxu0 0.0
          %1802 = vmatprep.subr.mxu0 0.0
          %1803 = vmatpush1.msra.mxu0 0.0
          %1804 = vmatprep.subr.mxu0 0.0
          %1805 = vmatpush1.msra.mxu0 0.0
          %1806 = vmatprep.subr.mxu0 0.0
          %1807 = vmatpush1.msra.mxu0 0.0
          %1808 = vmatprep.subr.mxu0 0.0
          %1809 = vmatpush1.msra.mxu0 0.0
          %1810 = vmatprep.subr.mxu0 0.0
          %1811 = vmatpush1.msra.mxu0 0.0
          %1812 = vmatprep.subr.mxu0 0.0
          %1813 = vmatpush1.msra.mxu0 0.0
          %1814 = vmatprep.subr.mxu0 0.0
          %1815 = vmatpush1.msra.mxu0 0.0
          %1816 = vmatprep.subr.mxu0 0.0
          %1817 = vmatpush1.msra.mxu0 0.0
          %1818 = vmatprep.subr.mxu0 0.0
          %1819 = vmatpush1.msra.mxu0 0.0
          %1820 = vmatprep.mubr.f32.mxu0 0.0
          %1821 = vmatmul.mubr.f32.gmra.mrb[0].mxu0 %v298
          %v1822 = vpop.f32.mrb[0].mxu0
          %v1823 = vadd.f32 0.0, %v1822
          %v1824 = vpop.f32.mrb[0].mxu0
          %1825 = vmatprep.mubr.f32.mxu0 0.0
          %1826 = vmatmul.mubr.f32.gmra.mrb[0].mxu0 %v301
          %v1827 = vpop.f32.mrb[0].mxu0
          %v1828 = vadd.f32 0.0, %v1827
          %v1829 = vpop.f32.mrb[0].mxu0
          %1830 = vdwg.mxu0
          %1831 = vmatprep.subr.mxu0 0.0
          %1832 = vmatpush1.msra.mxu0 %v1751
          %1833 = vmatprep.subr.mxu0 0.0
          %1834 = vmatpush1.msra.mxu0 %v1752
          %1835 = vmatprep.subr.mxu0 0.0
          %1836 = vmatpush1.msra.mxu0 0.0
          %1837 = vmatprep.subr.mxu0 0.0
          %1838 = vmatpush1.msra.mxu0 0.0
          %1839 = vmatprep.subr.mxu0 0.0
          %1840 = vmatpush1.msra.mxu0 0.0
          %1841 = vmatprep.subr.mxu0 0.0
          %1842 = vmatpush1.msra.mxu0 0.0
          %1843 = vmatprep.subr.mxu0 0.0
          %1844 = vmatpush1.msra.mxu0 0.0
          %1845 = vmatprep.subr.mxu0 0.0
          %1846 = vmatpush1.msra.mxu0 0.0
          %1847 = vmatprep.subr.mxu0 0.0
          %1848 = vmatpush1.msra.mxu0 0.0
          %1849 = vmatprep.subr.mxu0 0.0
          %1850 = vmatpush1.msra.mxu0 0.0
          %1851 = vmatprep.subr.mxu0 0.0
          %1852 = vmatpush1.msra.mxu0 0.0
          %1853 = vmatprep.subr.mxu0 0.0
          %1854 = vmatpush1.msra.mxu0 0.0
          %1855 = vmatprep.subr.mxu0 0.0
          %1856 = vmatpush1.msra.mxu0 0.0
          %1857 = vmatprep.subr.mxu0 0.0
          %1858 = vmatpush1.msra.mxu0 0.0
          %1859 = vmatprep.subr.mxu0 0.0
          %1860 = vmatpush1.msra.mxu0 0.0
          %1861 = vmatprep.subr.mxu0 0.0
          %1862 = vmatpush1.msra.mxu0 0.0
          %1863 = vmatprep.subr.mxu0 0.0
          %1864 = vmatpush1.msra.mxu0 0.0
          %1865 = vmatprep.subr.mxu0 0.0
          %1866 = vmatpush1.msra.mxu0 0.0
          %1867 = vmatprep.subr.mxu0 0.0
          %1868 = vmatpush1.msra.mxu0 0.0
          %1869 = vmatprep.subr.mxu0 0.0
          %1870 = vmatpush1.msra.mxu0 0.0
          %1871 = vmatprep.subr.mxu0 0.0
          %1872 = vmatpush1.msra.mxu0 0.0
          %1873 = vmatprep.subr.mxu0 0.0
          %1874 = vmatpush1.msra.mxu0 0.0
          %1875 = vmatprep.subr.mxu0 0.0
          %1876 = vmatpush1.msra.mxu0 0.0
          %1877 = vmatprep.subr.mxu0 0.0
          %1878 = vmatpush1.msra.mxu0 0.0
          %1879 = vmatprep.subr.mxu0 0.0
          %1880 = vmatpush1.msra.mxu0 0.0
          %1881 = vmatprep.subr.mxu0 0.0
          %1882 = vmatpush1.msra.mxu0 0.0
          %1883 = vmatprep.subr.mxu0 0.0
          %1884 = vmatpush1.msra.mxu0 0.0
          %1885 = vmatprep.subr.mxu0 0.0
          %1886 = vmatpush1.msra.mxu0 0.0
          %1887 = vmatprep.subr.mxu0 0.0
          %1888 = vmatpush1.msra.mxu0 0.0
          %1889 = vmatprep.subr.mxu0 0.0
          %1890 = vmatpush1.msra.mxu0 0.0
          %1891 = vmatprep.subr.mxu0 0.0
          %1892 = vmatpush1.msra.mxu0 0.0
          %1893 = vmatprep.subr.mxu0 0.0
          %1894 = vmatpush1.msra.mxu0 0.0
          %1895 = vmatprep.mubr.f32.mxu0 0.0
          %1896 = vmatmul.mubr.f32.gmra.mrb[0].mxu0 %v379
          %v1897 = vpop.f32.mrb[0].mxu0
          %v1898 = vadd.f32 %v1823, %v1897
          %v1899 = vpop.f32.mrb[0].mxu0
          %1900 = vmatprep.mubr.f32.mxu0 0.0
          %1901 = vmatmul.mubr.f32.gmra.mrb[0].mxu0 %v382
          %v1902 = vpop.f32.mrb[0].mxu0
          %v1903 = vadd.f32 %v1828, %v1902
          %v1904 = vpop.f32.mrb[0].mxu0
          %1905 = vdwg.mxu0
          %s1906 = scalar_lea.vmem [#allocation7], 96
          %v1907 = vld [vmem:[%s1906] sm:$0xff]
          %v1908 = vld [vmem:[%s1906 + $0x8] sm:$0xff]
          %v1910 = vsel %vm274, %v1907, 0
          %v1913 = vsel %vm274, %v1908, 0
          %1915 = vmatprep.subr.mxu0 0.0
          %1916 = vmatpush1.msra.mxu0 %v1898
          %1917 = vmatprep.subr.mxu0 0.0
          %1918 = vmatpush1.msra.mxu0 %v1903
          %1919 = vmatprep.subr.mxu0 0.0
          %1920 = vmatpush1.msra.mxu0 0.0
          %1921 = vmatprep.subr.mxu0 0.0
          %1922 = vmatpush1.msra.mxu0 0.0
          %1923 = vmatprep.subr.mxu0 0.0
          %1924 = vmatpush1.msra.mxu0 0.0
          %1925 = vmatprep.subr.mxu0 0.0
          %1926 = vmatpush1.msra.mxu0 0.0
          %1927 = vmatprep.subr.mxu0 0.0
          %1928 = vmatpush1.msra.mxu0 0.0
          %1929 = vmatprep.subr.mxu0 0.0
          %1930 = vmatpush1.msra.mxu0 0.0
          %1931 = vmatprep.subr.mxu0 0.0
          %1932 = vmatpush1.msra.mxu0 0.0
          %1933 = vmatprep.subr.mxu0 0.0
          %1934 = vmatpush1.msra.mxu0 0.0
          %1935 = vmatprep.subr.mxu0 0.0
          %1936 = vmatpush1.msra.mxu0 0.0
          %1937 = vmatprep.subr.mxu0 0.0
          %1938 = vmatpush1.msra.mxu0 0.0
          %1939 = vmatprep.subr.mxu0 0.0
          %1940 = vmatpush1.msra.mxu0 0.0
          %1941 = vmatprep.subr.mxu0 0.0
          %1942 = vmatpush1.msra.mxu0 0.0
          %1943 = vmatprep.subr.mxu0 0.0
          %1944 = vmatpush1.msra.mxu0 0.0
          %1945 = vmatprep.subr.mxu0 0.0
          %1946 = vmatpush1.msra.mxu0 0.0
          %1947 = vmatprep.subr.mxu0 0.0
          %1948 = vmatpush1.msra.mxu0 0.0
          %1949 = vmatprep.subr.mxu0 0.0
          %1950 = vmatpush1.msra.mxu0 0.0
          %1951 = vmatprep.subr.mxu0 0.0
          %1952 = vmatpush1.msra.mxu0 0.0
          %1953 = vmatprep.subr.mxu0 0.0
          %1954 = vmatpush1.msra.mxu0 0.0
          %1955 = vmatprep.subr.mxu0 0.0
          %1956 = vmatpush1.msra.mxu0 0.0
          %1957 = vmatprep.subr.mxu0 0.0
          %1958 = vmatpush1.msra.mxu0 0.0
          %1959 = vmatprep.subr.mxu0 0.0
          %1960 = vmatpush1.msra.mxu0 0.0
          %1961 = vmatprep.subr.mxu0 0.0
          %1962 = vmatpush1.msra.mxu0 0.0
          %1963 = vmatprep.subr.mxu0 0.0
          %1964 = vmatpush1.msra.mxu0 0.0
          %1965 = vmatprep.subr.mxu0 0.0
          %1966 = vmatpush1.msra.mxu0 0.0
          %1967 = vmatprep.subr.mxu0 0.0
          %1968 = vmatpush1.msra.mxu0 0.0
          %1969 = vmatprep.subr.mxu0 0.0
          %1970 = vmatpush1.msra.mxu0 0.0
          %1971 = vmatprep.subr.mxu0 0.0
          %1972 = vmatpush1.msra.mxu0 0.0
          %1973 = vmatprep.subr.mxu0 0.0
          %1974 = vmatpush1.msra.mxu0 0.0
          %1975 = vmatprep.subr.mxu0 0.0
          %1976 = vmatpush1.msra.mxu0 0.0
          %1977 = vmatprep.subr.mxu0 0.0
          %1978 = vmatpush1.msra.mxu0 0.0
          %1979 = vmatprep.mubr.f32.mxu0 0.0
          %1980 = vmatmul.mubr.f32.gmra.mrb[0].mxu0 %v1910
          %v1981 = vpop.f32.mrb[0].mxu0
          %v1982 = vadd.f32 0.0, %v1981
          %v1983 = vpop.f32.mrb[0].mxu0
          %1984 = vmatprep.mubr.f32.mxu0 0.0
          %1985 = vmatmul.mubr.f32.gmra.mrb[0].mxu0 %v1913
          %v1986 = vpop.f32.mrb[0].mxu0
          %v1987 = vadd.f32 0.0, %v1986
          %v1988 = vpop.f32.mrb[0].mxu0
          %1989 = vdwg.mxu0
          %v1990 = vadd.f32 %v1748, %v1982
          %v1991 = vadd.f32 %v1749, %v1987
          %v1992 = vxor.u32 %v1990, 2147483648
          %v1993 = vxor.u32 %v1991, 2147483648
          %v1994 = vmul.f32 %v1992, 1.442695
          %v1995 = vpow.pop %v1994
          %v1996 = vmul.f32 %v1993, 1.442695
          %v1997 = vpow.pop %v1996
          %v1998 = vadd.f32 %v1995, 1.0
          %v1999 = vadd.f32 %v1997, 1.0
          %v2000 = vrcp.pop %v1998
          %v2001 = vmul.f32 1.0, %v2000
          %v2002 = vrcp.pop %v1999
          %v2003 = vmul.f32 1.0, %v2002
          %2004 = vst.msk [vmem:[%s234] sm:$0xff] %vm274, %v2001
          %2005 = vst.msk [vmem:[%s234 + $0x8] sm:$0xff] %vm274, %v2003
        $region52: #{tpu_custom_call.1} parent=31 // pred_fallthru
          _
        %s2006 = sand.u32 %s111, 1
        %s2007 = scalar_lea.sflag [#allocation6], %s2006
        %s2008 = sand.u32 %s111, 1
        %s2009 = smul.addr %s2008, 16
        %s2010 = scalar_lea.vmem [#allocation10], %s2009
        // Predicated region
        $region53: #{tpu_custom_call.1} parent=31 // pred_check
          %p2011 = pneg %p121
        $region54: #{tpu_custom_call.1} parent=31 // pred_check_branch
          %2013 = sbr.rel (%p2011) target = $region56
        $region55: #{tpu_custom_call.1} parent=31 // pred_region
          %s2015 = ssub.s32 256, 256
          %2016 = vsyncadd %s2007, %s2015
          %s2017 = smul.addr %s25, 2
          %s2018 = smul.addr %s2017, 128
          %s2019 = scalar_lea.hbm %s3, %s2018
          %s2020 = sshll.u32 %s2010, 4
          %s2021 = int_to_ptr.vmem [resolvable:$true] %s2020
          %2026 = dma.vmem_to_hbm [thread:$0]  %s2021, 256, %s2019, %s2007, 128, 128, 8
        $region56: #{tpu_custom_call.1} parent=31 // pred_fallthru
          _
      $region32: #{tpu_custom_call.1} parent=5 // pred_fallthru
        _
      %p2027 = scmp.le.s32.totalorder 2, %s16
      // Predicated region
      $region57: #{tpu_custom_call.1} parent=5 // pred_check
        %p2028 = pneg %p2027
      $region58: #{tpu_custom_call.1} parent=5 // pred_check_branch
        %2030 = sbr.rel (%p2028) target = $region60
      $region59: #{tpu_custom_call.1} parent=5 // pred_region
        %s2031 = ssub.s32 %s16, 2
        // Predicated region
        $region61: #{tpu_custom_call.1} parent=59 // pred_check
          %p2032 = pneg %p127
        $region62: #{tpu_custom_call.1} parent=59 // pred_check_branch
          %2034 = sbr.rel (%p2032) target = $region64
        $region63: #{tpu_custom_call.1} parent=59 // pred_region
          %s2035 = sand.u32 %s112, 1
          %s2036 = scalar_lea.sflag [#allocation6], %s2035
          %s2037 = sand.u32 %s112, 1
          %s2038 = smul.addr %s2037, 16
          %s2039 = scalar_lea.vmem [#allocation10], %s2038
          %2040 = dma.done %s2036, 256
        $region64: #{tpu_custom_call.1} parent=59 // pred_fallthru
          _
      $region60: #{tpu_custom_call.1} parent=5 // pred_fallthru
        _
    $region6: #{tpu_custom_call.1} parent=1 // loop_footer
      %s20 = sadd.s32 1, %s16
    $region7: #{tpu_custom_call.1} parent=1 // loop_footer_branch
      %15 = sbr.rel target = $region3
    $region8: #{tpu_custom_call.1} parent=1 // loop_exit
      _
    %2041 = vsyncpa [#allocation5], 1
    %s2042 = scalar_lea.sflag [#allocation5], 1
    %2043 = vsyncpa %s2042, 1
    %2044 = vsyncpa [#allocation8], 1
    %2045 = vsyncpa [#allocation6], 1
    %s2046 = scalar_lea.sflag [#allocation6], 1
    %2047 = vsyncpa %s2046, 1

</llo_original>
